<compile_context>
chip_gen: v6e
topology: v6e:2x2x1
jax: 0.10.0
libtpu: 0.0.40
codegen_flags: <defaults>
</compile_context>

<pallas_src>
import functools
import math

import jax
import jax.numpy as jnp
from jax.experimental import pallas as pl
from jax.experimental.pallas import tpu as pltpu


# --------------------------------------------------------------------------
# Pallas kernel
# --------------------------------------------------------------------------
def _attention_kernel(*refs, num_heads, head_features, has_bias):
    if has_bias:
        q_ref, k_ref, v_ref, bias_ref, w_ref, b_ref, o_ref, cat_ref = refs
    else:
        q_ref, k_ref, v_ref, w_ref, b_ref, o_ref, cat_ref = refs
        bias_ref = None

    D = head_features
    for h in range(num_heads):                       # static unroll, H is small
        qh = q_ref[0, h]                             # (TQ, D), pre-scaled by D**-0.5
        kh = k_ref[0, h]                             # (D, N) -- K pre-transposed
        vh = v_ref[0, h]                             # (N, D)

        # sim = (q * scale) @ k^T  (MXU, f32 accumulate, no in-kernel transpose)
        sim = jnp.dot(qh, kh, preferred_element_type=jnp.float32)   # (TQ, N)
        if bias_ref is not None:
            sim = sim + bias_ref[h]                  # bias is pre-scaled in wrapper

        # numerically-stable softmax with DEFERRED normalization:
        # normalize the (TQ, D) PV result instead of the (TQ, N) probabilities.
        m = jnp.max(sim, axis=-1, keepdims=True)
        p = jnp.exp(sim - m)
        l = jnp.sum(p, axis=-1, keepdims=True)
        oh = jnp.dot(p.astype(vh.dtype), vh,
                     preferred_element_type=jnp.float32)            # (TQ, D)
        oh = oh * pl.reciprocal(l, approx=False)     # exact: keeps f32 parity

        # stage per-head output into the concat scratch (static lane slice)
        cat_ref[:, h * D:(h + 1) * D] = oh

    # Single output projection: contraction over H*D (MXU-efficient) instead of
    # H small K=D matmuls; head concat never leaves VMEM.
    proj = jnp.dot(cat_ref[...].astype(w_ref.dtype), w_ref[...],
                   preferred_element_type=jnp.float32)               # (TQ, F_pad)
    o_ref[0] = (proj + b_ref[...]).astype(o_ref.dtype)


# --------------------------------------------------------------------------
# Wrapper
# --------------------------------------------------------------------------
def _choose_q_tile(n):
    """Largest query tile <= 256 that divides n (keeps (8,128) rules happy)."""
    if n <= 256:
        return n
    for t in (256, 128, 64, 32, 16, 8):
        if n % t == 0:
            return t
    return n


def attention_base(q, k, v, w_out, b_out, *, num_heads, head_features,
                   rel_pos_bias=None):
    """AttentionBase.forward.

    q, k, v : (B, N, H*D) ; w_out : (F, H*D) ; b_out : (F,)
    rel_pos_bias : optional (H, N, N) additive bias (use_rel_pos=True path).
    Returns (B, N, F).
    """
    B, N, M = q.shape
    H, D = num_heads, head_features
    assert M == H * D
    F = w_out.shape[0]
    scale = float(D) ** -0.5

    # Fold the softmax scale into q (and into the bias) OUTSIDE the kernel:
    #   scale * (q @ k^T + bias) == (q*scale) @ k^T + bias*scale
    q = q * jnp.asarray(scale, q.dtype)

    def split_heads(x):          # 'b n (h d) -> b h n d' (done once, outside)
        return x.reshape(B, N, H, D).transpose(0, 2, 1, 3)

    q4 = split_heads(q)                                        # (B, H, N, D)
    v4 = split_heads(v)                                        # (B, H, N, D)
    k4t = k.reshape(B, N, H, D).transpose(0, 2, 3, 1)          # (B, H, D, N)

    # Lane-dense output stores: pad F up to a multiple of 128 (sliced off below).
    F_pad = max(128, pl.cdiv(F, 128) * 128)
    w_t = jnp.transpose(w_out, (1, 0))                         # (H*D, F)
    if F_pad != F:
        w_t = jnp.pad(w_t, ((0, 0), (0, F_pad - F)))
        b2 = jnp.pad(b_out, (0, F_pad - F)).reshape(1, F_pad)
    else:
        b2 = b_out.reshape(1, F_pad)

    TQ = _choose_q_tile(N)
    n_q_tiles = N // TQ

    has_bias = rel_pos_bias is not None

    inputs = [q4, k4t, v4]
    in_specs = [
        pl.BlockSpec((1, H, TQ, D), lambda b, t: (b, 0, t, 0)),
        pl.BlockSpec((1, H, D, N), lambda b, t: (b, 0, 0, 0)),
        pl.BlockSpec((1, H, N, D), lambda b, t: (b, 0, 0, 0)),
    ]
    if has_bias:
        # Reference adds the bias BEFORE the scale -> pre-scale the bias too.
        bias_scaled = rel_pos_bias * jnp.asarray(scale, rel_pos_bias.dtype)
        inputs.append(bias_scaled)
        in_specs.append(pl.BlockSpec((H, TQ, N), lambda b, t: (0, t, 0)))
    inputs += [w_t, b2]
    in_specs += [
        pl.BlockSpec((H * D, F_pad), lambda b, t: (0, 0)),
        pl.BlockSpec((1, F_pad), lambda b, t: (0, 0)),
    ]
    out_spec = pl.BlockSpec((1, TQ, F_pad), lambda b, t: (b, t, 0))

    # --- VMEM limit from actual block footprint (double-buffered) + headroom ---
    def _nbytes(shape, dt):
        return math.prod(shape) * jnp.dtype(dt).itemsize

    blk_bytes = (
        _nbytes((1, H, TQ, D), q4.dtype)
        + _nbytes((1, H, D, N), k4t.dtype)
        + _nbytes((1, H, N, D), v4.dtype)
        + (_nbytes((H, TQ, N), rel_pos_bias.dtype) if has_bias else 0)
        + _nbytes((H * D, F_pad), w_t.dtype)
        + _nbytes((1, F_pad), b2.dtype)
        + _nbytes((1, TQ, F_pad), q.dtype)
    )
    scratch_bytes = _nbytes((TQ, H * D), jnp.float32)
    vmem_limit = int(2 * blk_bytes * 2 + scratch_bytes)        # 2x buffers, 2x headroom
    vmem_limit = max(16 * 1024 * 1024, min(vmem_limit, 64 * 1024 * 1024))

    # --- advisory cost estimate for the XLA scheduler ---
    flops = 4 * B * H * N * N * D + 2 * B * N * H * D * F_pad
    transcendentals = B * H * N * N
    bytes_accessed = (
        3 * _nbytes((B, H, N, D), q.dtype)
        + (B * _nbytes((H, N, N), rel_pos_bias.dtype) if has_bias else 0)
        + _nbytes((H * D, F_pad), w_t.dtype)
        + _nbytes((B, N, F_pad), q.dtype)
    )

    kernel = functools.partial(_attention_kernel, num_heads=H,
                               head_features=D, has_bias=has_bias)

    out = pl.pallas_call(
        kernel,
        out_shape=jax.ShapeDtypeStruct((B, N, F_pad), q.dtype),
        grid_spec=pltpu.PrefetchScalarGridSpec(
            num_scalar_prefetch=0,
            grid=(B, n_q_tiles),
            in_specs=in_specs,
            out_specs=out_spec,
            scratch_shapes=[pltpu.VMEM((TQ, H * D), jnp.float32)],
        ),
        compiler_params=pltpu.CompilerParams(
            dimension_semantics=("parallel", "parallel"),
            vmem_limit_bytes=vmem_limit),
        cost_estimate=pl.CostEstimate(
            flops=flops, transcendentals=transcendentals,
            bytes_accessed=bytes_accessed),
    )(*inputs)

    return out[..., :F] if F_pad != F else out


# --------------------------------------------------------------------------
# RelativePositionBias (pure JAX: data-dependent gather stays in XLA)
# --------------------------------------------------------------------------
def _relative_position_bucket(relative_position, num_buckets, max_distance):
    num_buckets = num_buckets // 2
    ret = (relative_position >= 0).astype(jnp.int32) * num_buckets
    n = jnp.abs(relative_position)
    max_exact = num_buckets // 2
    is_small = n < max_exact
    val_if_large = max_exact + (
        jnp.log(n.astype(jnp.float32) / max_exact)
        / math.log(max_distance / max_exact)
        * (num_buckets - max_exact)
    ).astype(jnp.int32)
    val_if_large = jnp.minimum(val_if_large, num_buckets - 1)
    ret = ret + jnp.where(is_small, n, val_if_large)
    return ret


def relative_position_bias(num_queries, num_keys, emb, num_buckets, max_distance):
    """emb: (num_buckets, num_heads). Returns (num_heads, num_queries, num_keys)."""
    i, j = num_queries, num_keys
    q_pos = jnp.arange(j - i, j, dtype=jnp.int32)
    k_pos = jnp.arange(j, dtype=jnp.int32)
    rel_pos = k_pos[None, :] - q_pos[:, None]                     # (i, j)
    bucket = _relative_position_bucket(rel_pos, num_buckets, max_distance)
    bias = emb[bucket]                                            # (i, j, H)
    return jnp.transpose(bias, (2, 0, 1))                         # (H, i, j)


# --------------------------------------------------------------------------
# Pure-JAX reference of AttentionBase.forward
# --------------------------------------------------------------------------
def reference(q, k, v, w_out, b_out, *, num_heads, head_features,
              rel_pos_bias=None):
    B, N, M = q.shape
    H, D = num_heads, head_features
    scale = float(D) ** -0.5

    def split(x):
        return x.reshape(B, N, H, D).transpose(0, 2, 1, 3)

    q4, k4, v4 = split(q), split(k), split(v)
    sim = jnp.einsum('bhnd,bhmd->bhnm', q4, k4)
    if rel_pos_bias is not None:
        sim = sim + rel_pos_bias[None]
    sim = sim * scale
    attn = jax.nn.softmax(sim, axis=-1)
    out = jnp.einsum('bhnm,bhmd->bhnd', attn, v4)
    out = out.transpose(0, 2, 1, 3).reshape(B, N, H * D)
    return out @ w_out.T + b_out[None, None, :]


if __name__ == "__main__":
    key = jax.random.PRNGKey(0)
    kq, kk, kv, kw, kb, ke = jax.random.split(key, 6)

    B, N = 2, 16
    FEATURES = 32
    NUM_HEADS = 4
    HEAD_FEATURES = 16
    MID = NUM_HEADS * HEAD_FEATURES

    q = jax.random.normal(kq, (B, N, MID), dtype=jnp.float32)
    k = jax.random.normal(kk, (B, N, MID), dtype=jnp.float32)
    v = jax.random.normal(kv, (B, N, MID), dtype=jnp.float32)

    bound = 1.0 / (MID ** 0.5)           # nn.Linear default init bounds
    w_out = jax.random.uniform(kw, (FEATURES, MID),
                               minval=-bound, maxval=bound, dtype=jnp.float32)
    b_out = jax.random.uniform(kb, (FEATURES,),
                               minval=-bound, maxval=bound, dtype=jnp.float32)

    # --- use_rel_pos=False path ---
    out = attention_base(q, k, v, w_out, b_out,
                         num_heads=NUM_HEADS, head_features=HEAD_FEATURES)
    out = jax.block_until_ready(out)
    ref = reference(q, k, v, w_out, b_out,
                    num_heads=NUM_HEADS, head_features=HEAD_FEATURES)
    assert out.shape == (B, N, FEATURES)
    assert jnp.allclose(out, ref, atol=1e-4, rtol=1e-4)

    # --- use_rel_pos=True path (bias precomputed in JAX, added in-kernel) ---
    NUM_BUCKETS, MAX_DISTANCE = 32, 64
    rel_emb = jax.random.normal(ke, (NUM_BUCKETS, NUM_HEADS), dtype=jnp.float32)
    bias = relative_position_bias(N, N, rel_emb, NUM_BUCKETS, MAX_DISTANCE)
    out_b = attention_base(q, k, v, w_out, b_out,
                           num_heads=NUM_HEADS, head_features=HEAD_FEATURES,
                           rel_pos_bias=bias)
    out_b = jax.block_until_ready(out_b)
    ref_b = reference(q, k, v, w_out, b_out,
                      num_heads=NUM_HEADS, head_features=HEAD_FEATURES,
                      rel_pos_bias=bias)
    assert jnp.allclose(out_b, ref_b, atol=1e-4, rtol=1e-4)

    print("KERNEL_OK")
</pallas_src>

<mosaic_0001>
module attributes {stable_mosaic.version = 11 : i64} {
  func.func @_attention_kernel(%arg0: i32, %arg1: i32, %arg2: memref<1x4x16x16xf32, #tpu.memory_space<vmem>>, %arg3: memref<1x4x16x16xf32, #tpu.memory_space<vmem>>, %arg4: memref<1x4x16x16xf32, #tpu.memory_space<vmem>>, %arg5: memref<64x128xf32, #tpu.memory_space<vmem>>, %arg6: memref<1x128xf32, #tpu.memory_space<vmem>>, %arg7: memref<1x16x128xf32, #tpu.memory_space<vmem>>, %arg8: memref<16x64xf32, #tpu.memory_space<vmem>>) attributes {dimension_semantics = [#tpu.dimension_semantics<parallel>, #tpu.dimension_semantics<parallel>], iteration_bounds = array<i64: 2, 1>, scalar_prefetch = 0 : i64, scratch_operands = 1 : i64, tpu.core_type = #tpu.core_type<tc>, window_params = [{transform_indices = @transform_0, window_bounds = array<i64: 1, 4, 16, 16>}, {transform_indices = @transform_1, window_bounds = array<i64: 1, 4, 16, 16>}, {transform_indices = @transform_2, window_bounds = array<i64: 1, 4, 16, 16>}, {pipeline_mode = #tpu.pipeline_mode<synchronous>, transform_indices = @transform_3, window_bounds = array<i64: 64, 128>}, {pipeline_mode = #tpu.pipeline_mode<synchronous>, transform_indices = @transform_4, window_bounds = array<i64: 1, 128>}, {transform_indices = @transform_5, window_bounds = array<i64: 1, 16, 128>}]} {
    %c0 = arith.constant 0 : index
    %c0_0 = arith.constant 0 : index
    %c0_1 = arith.constant 0 : index
    %c0_2 = arith.constant 0 : index
    %0 = vector.load %arg2[%c0, %c0_0, %c0_1, %c0_2] : memref<1x4x16x16xf32, #tpu.memory_space<vmem>>, vector<1x1x16x16xf32>
    %1 = vector.shape_cast %0 : vector<1x1x16x16xf32> to vector<16x16xf32>
    %c0_3 = arith.constant 0 : index
    %c0_4 = arith.constant 0 : index
    %c0_5 = arith.constant 0 : index
    %c0_6 = arith.constant 0 : index
    %2 = vector.load %arg3[%c0_3, %c0_4, %c0_5, %c0_6] : memref<1x4x16x16xf32, #tpu.memory_space<vmem>>, vector<1x1x16x16xf32>
    %3 = vector.shape_cast %2 : vector<1x1x16x16xf32> to vector<16x16xf32>
    %c0_7 = arith.constant 0 : index
    %c0_8 = arith.constant 0 : index
    %c0_9 = arith.constant 0 : index
    %c0_10 = arith.constant 0 : index
    %4 = vector.load %arg4[%c0_7, %c0_8, %c0_9, %c0_10] : memref<1x4x16x16xf32, #tpu.memory_space<vmem>>, vector<1x1x16x16xf32>
    %5 = vector.shape_cast %4 : vector<1x1x16x16xf32> to vector<16x16xf32>
    %cst = arith.constant dense<0.000000e+00> : vector<16x16xf32>
    %6 = tpu.matmul %1, %3, %cst {dimension_numbers = #tpu.dot_dimension_numbers<[1], [0], [0], [1], [0, 0, 1, 1], [], []>} : vector<16x16xf32>, vector<16x16xf32>, vector<16x16xf32> -> vector<16x16xf32>
    %cst_11 = arith.constant dense<0xFF800000> : vector<16xf32>
    %7 = vector.multi_reduction <maximumf>, %6, %cst_11 [1] : vector<16x16xf32> to vector<16xf32>
    %8 = vector.shape_cast %7 : vector<16xf32> to vector<16x1xf32>
    %9 = vector.broadcast %8 : vector<16x1xf32> to vector<16x16xf32>
    %10 = arith.subf %6, %9 : vector<16x16xf32>
    %11 = math.exp %10 : vector<16x16xf32>
    %cst_12 = arith.constant dense<0.000000e+00> : vector<16xf32>
    %12 = vector.multi_reduction <add>, %11, %cst_12 [1] : vector<16x16xf32> to vector<16xf32>
    %13 = vector.shape_cast %12 : vector<16xf32> to vector<16x1xf32>
    %cst_13 = arith.constant dense<0.000000e+00> : vector<16x16xf32>
    %14 = tpu.matmul %11, %5, %cst_13 {dimension_numbers = #tpu.dot_dimension_numbers<[1], [0], [0], [1], [0, 0, 1, 1], [], []>} : vector<16x16xf32>, vector<16x16xf32>, vector<16x16xf32> -> vector<16x16xf32>
    %15 = tpu.reciprocal %13 : vector<16x1xf32> -> vector<16x1xf32>
    %16 = vector.broadcast %15 : vector<16x1xf32> to vector<16x16xf32>
    %17 = arith.mulf %14, %16 : vector<16x16xf32>
    %c0_14 = arith.constant 0 : index
    %c0_15 = arith.constant 0 : index
    %18 = vector.load %arg8[%c0_14, %c0_15] : memref<16x64xf32, #tpu.memory_space<vmem>>, vector<16x16xf32>
    tpu.vector_store %arg8[%c0_14, %c0_15], %17 {strides = array<i32>} : memref<16x64xf32, #tpu.memory_space<vmem>>, vector<16x16xf32>,
    %c0_16 = arith.constant 0 : index
    %c1 = arith.constant 1 : index
    %c0_17 = arith.constant 0 : index
    %c0_18 = arith.constant 0 : index
    %19 = vector.load %arg2[%c0_16, %c1, %c0_17, %c0_18] : memref<1x4x16x16xf32, #tpu.memory_space<vmem>>, vector<1x1x16x16xf32>
    %20 = vector.shape_cast %19 : vector<1x1x16x16xf32> to vector<16x16xf32>
    %c0_19 = arith.constant 0 : index
    %c1_20 = arith.constant 1 : index
    %c0_21 = arith.constant 0 : index
    %c0_22 = arith.constant 0 : index
    %21 = vector.load %arg3[%c0_19, %c1_20, %c0_21, %c0_22] : memref<1x4x16x16xf32, #tpu.memory_space<vmem>>, vector<1x1x16x16xf32>
    %22 = vector.shape_cast %21 : vector<1x1x16x16xf32> to vector<16x16xf32>
    %c0_23 = arith.constant 0 : index
    %c1_24 = arith.constant 1 : index
    %c0_25 = arith.constant 0 : index
    %c0_26 = arith.constant 0 : index
    %23 = vector.load %arg4[%c0_23, %c1_24, %c0_25, %c0_26] : memref<1x4x16x16xf32, #tpu.memory_space<vmem>>, vector<1x1x16x16xf32>
    %24 = vector.shape_cast %23 : vector<1x1x16x16xf32> to vector<16x16xf32>
    %cst_27 = arith.constant dense<0.000000e+00> : vector<16x16xf32>
    %25 = tpu.matmul %20, %22, %cst_27 {dimension_numbers = #tpu.dot_dimension_numbers<[1], [0], [0], [1], [0, 0, 1, 1], [], []>} : vector<16x16xf32>, vector<16x16xf32>, vector<16x16xf32> -> vector<16x16xf32>
    %cst_28 = arith.constant dense<0xFF800000> : vector<16xf32>
    %26 = vector.multi_reduction <maximumf>, %25, %cst_28 [1] : vector<16x16xf32> to vector<16xf32>
    %27 = vector.shape_cast %26 : vector<16xf32> to vector<16x1xf32>
    %28 = vector.broadcast %27 : vector<16x1xf32> to vector<16x16xf32>
    %29 = arith.subf %25, %28 : vector<16x16xf32>
    %30 = math.exp %29 : vector<16x16xf32>
    %cst_29 = arith.constant dense<0.000000e+00> : vector<16xf32>
    %31 = vector.multi_reduction <add>, %30, %cst_29 [1] : vector<16x16xf32> to vector<16xf32>
    %32 = vector.shape_cast %31 : vector<16xf32> to vector<16x1xf32>
    %cst_30 = arith.constant dense<0.000000e+00> : vector<16x16xf32>
    %33 = tpu.matmul %30, %24, %cst_30 {dimension_numbers = #tpu.dot_dimension_numbers<[1], [0], [0], [1], [0, 0, 1, 1], [], []>} : vector<16x16xf32>, vector<16x16xf32>, vector<16x16xf32> -> vector<16x16xf32>
    %34 = tpu.reciprocal %32 : vector<16x1xf32> -> vector<16x1xf32>
    %35 = vector.broadcast %34 : vector<16x1xf32> to vector<16x16xf32>
    %36 = arith.mulf %33, %35 : vector<16x16xf32>
    %c0_31 = arith.constant 0 : index
    %c16 = arith.constant 16 : index
    %37 = vector.load %arg8[%c0_31, %c16] : memref<16x64xf32, #tpu.memory_space<vmem>>, vector<16x16xf32>
    tpu.vector_store %arg8[%c0_31, %c16], %36 {strides = array<i32>} : memref<16x64xf32, #tpu.memory_space<vmem>>, vector<16x16xf32>,
    %c0_32 = arith.constant 0 : index
    %c2 = arith.constant 2 : index
    %c0_33 = arith.constant 0 : index
    %c0_34 = arith.constant 0 : index
    %38 = vector.load %arg2[%c0_32, %c2, %c0_33, %c0_34] : memref<1x4x16x16xf32, #tpu.memory_space<vmem>>, vector<1x1x16x16xf32>
    %39 = vector.shape_cast %38 : vector<1x1x16x16xf32> to vector<16x16xf32>
    %c0_35 = arith.constant 0 : index
    %c2_36 = arith.constant 2 : index
    %c0_37 = arith.constant 0 : index
    %c0_38 = arith.constant 0 : index
    %40 = vector.load %arg3[%c0_35, %c2_36, %c0_37, %c0_38] : memref<1x4x16x16xf32, #tpu.memory_space<vmem>>, vector<1x1x16x16xf32>
    %41 = vector.shape_cast %40 : vector<1x1x16x16xf32> to vector<16x16xf32>
    %c0_39 = arith.constant 0 : index
    %c2_40 = arith.constant 2 : index
    %c0_41 = arith.constant 0 : index
    %c0_42 = arith.constant 0 : index
    %42 = vector.load %arg4[%c0_39, %c2_40, %c0_41, %c0_42] : memref<1x4x16x16xf32, #tpu.memory_space<vmem>>, vector<1x1x16x16xf32>
    %43 = vector.shape_cast %42 : vector<1x1x16x16xf32> to vector<16x16xf32>
    %cst_43 = arith.constant dense<0.000000e+00> : vector<16x16xf32>
    %44 = tpu.matmul %39, %41, %cst_43 {dimension_numbers = #tpu.dot_dimension_numbers<[1], [0], [0], [1], [0, 0, 1, 1], [], []>} : vector<16x16xf32>, vector<16x16xf32>, vector<16x16xf32> -> vector<16x16xf32>
    %cst_44 = arith.constant dense<0xFF800000> : vector<16xf32>
    %45 = vector.multi_reduction <maximumf>, %44, %cst_44 [1] : vector<16x16xf32> to vector<16xf32>
    %46 = vector.shape_cast %45 : vector<16xf32> to vector<16x1xf32>
    %47 = vector.broadcast %46 : vector<16x1xf32> to vector<16x16xf32>
    %48 = arith.subf %44, %47 : vector<16x16xf32>
    %49 = math.exp %48 : vector<16x16xf32>
    %cst_45 = arith.constant dense<0.000000e+00> : vector<16xf32>
    %50 = vector.multi_reduction <add>, %49, %cst_45 [1] : vector<16x16xf32> to vector<16xf32>
    %51 = vector.shape_cast %50 : vector<16xf32> to vector<16x1xf32>
    %cst_46 = arith.constant dense<0.000000e+00> : vector<16x16xf32>
    %52 = tpu.matmul %49, %43, %cst_46 {dimension_numbers = #tpu.dot_dimension_numbers<[1], [0], [0], [1], [0, 0, 1, 1], [], []>} : vector<16x16xf32>, vector<16x16xf32>, vector<16x16xf32> -> vector<16x16xf32>
    %53 = tpu.reciprocal %51 : vector<16x1xf32> -> vector<16x1xf32>
    %54 = vector.broadcast %53 : vector<16x1xf32> to vector<16x16xf32>
    %55 = arith.mulf %52, %54 : vector<16x16xf32>
    %c0_47 = arith.constant 0 : index
    %c32 = arith.constant 32 : index
    %56 = vector.load %arg8[%c0_47, %c32] : memref<16x64xf32, #tpu.memory_space<vmem>>, vector<16x16xf32>
    tpu.vector_store %arg8[%c0_47, %c32], %55 {strides = array<i32>} : memref<16x64xf32, #tpu.memory_space<vmem>>, vector<16x16xf32>,
    %c0_48 = arith.constant 0 : index
    %c3 = arith.constant 3 : index
    %c0_49 = arith.constant 0 : index
    %c0_50 = arith.constant 0 : index
    %57 = vector.load %arg2[%c0_48, %c3, %c0_49, %c0_50] : memref<1x4x16x16xf32, #tpu.memory_space<vmem>>, vector<1x1x16x16xf32>
    %58 = vector.shape_cast %57 : vector<1x1x16x16xf32> to vector<16x16xf32>
    %c0_51 = arith.constant 0 : index
    %c3_52 = arith.constant 3 : index
    %c0_53 = arith.constant 0 : index
    %c0_54 = arith.constant 0 : index
    %59 = vector.load %arg3[%c0_51, %c3_52, %c0_53, %c0_54] : memref<1x4x16x16xf32, #tpu.memory_space<vmem>>, vector<1x1x16x16xf32>
    %60 = vector.shape_cast %59 : vector<1x1x16x16xf32> to vector<16x16xf32>
    %c0_55 = arith.constant 0 : index
    %c3_56 = arith.constant 3 : index
    %c0_57 = arith.constant 0 : index
    %c0_58 = arith.constant 0 : index
    %61 = vector.load %arg4[%c0_55, %c3_56, %c0_57, %c0_58] : memref<1x4x16x16xf32, #tpu.memory_space<vmem>>, vector<1x1x16x16xf32>
    %62 = vector.shape_cast %61 : vector<1x1x16x16xf32> to vector<16x16xf32>
    %cst_59 = arith.constant dense<0.000000e+00> : vector<16x16xf32>
    %63 = tpu.matmul %58, %60, %cst_59 {dimension_numbers = #tpu.dot_dimension_numbers<[1], [0], [0], [1], [0, 0, 1, 1], [], []>} : vector<16x16xf32>, vector<16x16xf32>, vector<16x16xf32> -> vector<16x16xf32>
    %cst_60 = arith.constant dense<0xFF800000> : vector<16xf32>
    %64 = vector.multi_reduction <maximumf>, %63, %cst_60 [1] : vector<16x16xf32> to vector<16xf32>
    %65 = vector.shape_cast %64 : vector<16xf32> to vector<16x1xf32>
    %66 = vector.broadcast %65 : vector<16x1xf32> to vector<16x16xf32>
    %67 = arith.subf %63, %66 : vector<16x16xf32>
    %68 = math.exp %67 : vector<16x16xf32>
    %cst_61 = arith.constant dense<0.000000e+00> : vector<16xf32>
    %69 = vector.multi_reduction <add>, %68, %cst_61 [1] : vector<16x16xf32> to vector<16xf32>
    %70 = vector.shape_cast %69 : vector<16xf32> to vector<16x1xf32>
    %cst_62 = arith.constant dense<0.000000e+00> : vector<16x16xf32>
    %71 = tpu.matmul %68, %62, %cst_62 {dimension_numbers = #tpu.dot_dimension_numbers<[1], [0], [0], [1], [0, 0, 1, 1], [], []>} : vector<16x16xf32>, vector<16x16xf32>, vector<16x16xf32> -> vector<16x16xf32>
    %72 = tpu.reciprocal %70 : vector<16x1xf32> -> vector<16x1xf32>
    %73 = vector.broadcast %72 : vector<16x1xf32> to vector<16x16xf32>
    %74 = arith.mulf %71, %73 : vector<16x16xf32>
    %c0_63 = arith.constant 0 : index
    %c48 = arith.constant 48 : index
    %75 = vector.load %arg8[%c0_63, %c48] : memref<16x64xf32, #tpu.memory_space<vmem>>, vector<16x16xf32>
    tpu.vector_store %arg8[%c0_63, %c48], %74 {strides = array<i32>} : memref<16x64xf32, #tpu.memory_space<vmem>>, vector<16x16xf32>,
    %c0_64 = arith.constant 0 : index
    %c0_65 = arith.constant 0 : index
    %76 = vector.load %arg8[%c0_64, %c0_65] : memref<16x64xf32, #tpu.memory_space<vmem>>, vector<16x64xf32>
    %c0_66 = arith.constant 0 : index
    %c0_67 = arith.constant 0 : index
    %77 = vector.load %arg5[%c0_66, %c0_67] : memref<64x128xf32, #tpu.memory_space<vmem>>, vector<64x128xf32>
    %cst_68 = arith.constant dense<0.000000e+00> : vector<16x128xf32>
    %78 = tpu.matmul %76, %77, %cst_68 {dimension_numbers = #tpu.dot_dimension_numbers<[1], [0], [0], [1], [0, 0, 1, 1], [], []>} : vector<16x64xf32>, vector<64x128xf32>, vector<16x128xf32> -> vector<16x128xf32>
    %c0_69 = arith.constant 0 : index
    %c0_70 = arith.constant 0 : index
    %79 = vector.load %arg6[%c0_69, %c0_70] : memref<1x128xf32, #tpu.memory_space<vmem>>, vector<1x128xf32>
    %80 = vector.broadcast %79 : vector<1x128xf32> to vector<16x128xf32>
    %81 = arith.addf %78, %80 : vector<16x128xf32>
    %c0_71 = arith.constant 0 : index
    %c0_72 = arith.constant 0 : index
    %c0_73 = arith.constant 0 : index
    %82 = vector.load %arg7[%c0_71, %c0_72, %c0_73] : memref<1x16x128xf32, #tpu.memory_space<vmem>>, vector<1x16x128xf32>
    %83 = vector.shape_cast %82 : vector<1x16x128xf32> to vector<16x128xf32>
    %84 = vector.shape_cast %81 : vector<16x128xf32> to vector<1x16x128xf32>
    tpu.vector_store %arg7[%c0_71, %c0_72, %c0_73], %84 {strides = array<i32>} : memref<1x16x128xf32, #tpu.memory_space<vmem>>, vector<1x16x128xf32>,
    return
  }
  func.func @transform_0(%arg0: i32, %arg1: i32) -> (i32, i32, i32, i32) {
    %c0_i32 = arith.constant 0 : i32
    %c0_i32_0 = arith.constant 0 : i32
    %c0_i32_1 = arith.constant 0 : i32
    return %arg0, %c0_i32, %arg1, %c0_i32_0 : i32, i32, i32, i32
  }
  func.func @transform_1(%arg0: i32, %arg1: i32) -> (i32, i32, i32, i32) {
    %c0_i32 = arith.constant 0 : i32
    %c0_i32_0 = arith.constant 0 : i32
    %c0_i32_1 = arith.constant 0 : i32
    %c0_i32_2 = arith.constant 0 : i32
    return %arg0, %c0_i32, %c0_i32_0, %c0_i32_1 : i32, i32, i32, i32
  }
  func.func @transform_2(%arg0: i32, %arg1: i32) -> (i32, i32, i32, i32) {
    %c0_i32 = arith.constant 0 : i32
    %c0_i32_0 = arith.constant 0 : i32
    %c0_i32_1 = arith.constant 0 : i32
    %c0_i32_2 = arith.constant 0 : i32
    return %arg0, %c0_i32, %c0_i32_0, %c0_i32_1 : i32, i32, i32, i32
  }
  func.func @transform_3(%arg0: i32, %arg1: i32) -> (i32, i32) {
    %c0_i32 = arith.constant 0 : i32
    %c0_i32_0 = arith.constant 0 : i32
    %c0_i32_1 = arith.constant 0 : i32
    return %c0_i32, %c0_i32_0 : i32, i32
  }
  func.func @transform_4(%arg0: i32, %arg1: i32) -> (i32, i32) {
    %c0_i32 = arith.constant 0 : i32
    %c0_i32_0 = arith.constant 0 : i32
    %c0_i32_1 = arith.constant 0 : i32
    return %c0_i32, %c0_i32_0 : i32, i32
  }
  func.func @transform_5(%arg0: i32, %arg1: i32) -> (i32, i32, i32) {
    %c0_i32 = arith.constant 0 : i32
    %c0_i32_0 = arith.constant 0 : i32
    return %arg0, %arg1, %c0_i32 : i32, i32, i32
  }
}

</mosaic_0001>

<llo_original>
// kernel: tpu_custom_call.1
$region0: #{tpu_custom_call.1}
  #allocation0 [shape = 'u32[]', space=smem, size = 0x4, offset = 0x4, fixed_abs, tag = 'smem constant byte address 0x4 - core index']
  #allocation1 [shape = 'u32[144,128]{1,0:T(1,128)}', space=vmem, size = 0x12000, scoped, tag = 'internal scratch']
  #allocation2 [shape = 'f32[16,64]{1,0:T(8,128)}', space=vmem, size = 0x2000, scoped, tag = 'scratch operand']
  %s0 = inlined_call_operand.hbm [shape: f32[2,4,16,16], index: 0, kind: input, shape index: {}]
  %s1 = inlined_call_operand.hbm [shape: f32[2,4,16,16], index: 1, kind: input, shape index: {}]
  %s2 = inlined_call_operand.hbm [shape: f32[2,4,16,16], index: 2, kind: input, shape index: {}]
  %s3 = inlined_call_operand.hbm [shape: f32[64,128], index: 3, kind: input, shape index: {}]
  %s4 = inlined_call_operand.vmem [shape: f32[1,128], index: 4, kind: input, shape index: {}]
  %s5 = inlined_call_operand.hbm [shape: f32[2,16,128], index: 5, kind: output, shape index: {}]
  %s6 = sld [smem:[#allocation0]]
  $region69: #{tpu_custom_call.1} parent=0
    _
  %s8 = ssub.s32 1, %s6
  %s9 = scalar_select 0, %s8, %s6
  $region1: #{tpu_custom_call.1} parent=0
    #allocation3 [shape = 'u8[65536]{0}', space=vmem, size = 0x10000, scoped, tag = 'input window, operand 0']
    #allocation4 [shape = 's32[2]{0}', space=sflag, size = 0x8, scoped, tag = 'scoped memory for tpu_custom_call.1']
    #allocation5 [shape = 's32[2]{0}', space=sflag, size = 0x8, scoped, tag = 'scoped memory for tpu_custom_call.1']
    #allocation6 [shape = 'u8[65536]{0}', space=vmem, size = 0x10000, scoped, tag = 'input window, operand 1']
    #allocation7 [shape = 's32[2]{0}', space=sflag, size = 0x8, scoped, tag = 'scoped memory for tpu_custom_call.1']
    #allocation8 [shape = 'u8[65536]{0}', space=vmem, size = 0x10000, scoped, tag = 'input window, operand 2']
    #allocation9 [shape = 'u8[32768]{0}', space=vmem, size = 0x8000, scoped, tag = 'input window, operand 3, single buffered']
    #allocation10 [shape = 's32[1]{0}', space=sflag, size = 0x4, scoped, tag = 'scoped memory for tpu_custom_call.1']
    #allocation11 [shape = 'u8[16384]{0}', space=vmem, size = 0x4000, scoped, tag = 'output window, operand 0']
    %10 = vsyncpa [#allocation4], 0
    %s11 = scalar_lea.sflag [#allocation4], 1
    %12 = vsyncpa %s11, 0
    %13 = vsyncpa [#allocation7], 0
    %s14 = scalar_lea.sflag [#allocation7], 1
    %15 = vsyncpa %s14, 0
    %16 = vsyncpa [#allocation10], 0
    %17 = vsyncpa [#allocation5], 0
    %s18 = scalar_lea.sflag [#allocation5], 1
    %19 = vsyncpa %s18, 0
    loop: start=0, step=1, limit=4
    $region2: #{tpu_custom_call.1} parent=1 // loop_pre_header
      _
    $region3: #{tpu_custom_call.1} parent=1 // loop_header
      %s21 = sphi 0, %s25
      %p22 = scmp.ge.s32.totalorder %s21, 4
      %s28 = sphi 0, %s40
      %s29 = sphi 0, %s36
      %s30 = sphi 0, %s28
      %s31 = sphi 0, %s29
      %s32 = sphi 0, %s30
      %s33 = sphi 0, %s31
      %s45 = sphi 0, %s47
      %s48 = sphi 0, %s45
      %s49 = sphi 0, %s48
      %s65 = sphi 0, %s49
      %s71 = sphi 0, %s73
      %s74 = sphi 0, %s71
      %s75 = sphi 0, %s74
      %s91 = sphi 0, %s75
      %s97 = sphi 0, %s99
      %s100 = sphi 0, %s97
      %s101 = sphi 0, %s100
      %s117 = sphi 0, %s101
      %s121 = sphi 0, %s121
      %s123 = sphi 0, %s121
      %s124 = sphi 0, %s123
      %s138 = sphi 0, %s124
      %s142 = sphi 0, %s142
      %s144 = sphi 0, %s142
      %s145 = sphi 0, %s144
      %s159 = sphi 0, %s145
      %s167 = sphi 0, %s169
      %s170 = sphi 0, %s167
      %s171 = sphi 0, %s170
      %s187 = sphi 0, %s171
    $region4: #{tpu_custom_call.1} parent=1 // loop_header_branch
      %24 = sbr.rel (%p22) target = $region8
    $region5: #{tpu_custom_call.1} parent=1 // loop_body
      %s26 = ssub.s32 %s21, 1
      %s27 = ssub.s32 %s21, 2
      %s34 = sadd.s32 1, %s29
      %p35 = scmp.ge.s32.totalorder %s34, 1
      %s36 = scalar_select %p35, 0, %s34
      %s37 = sadd.s32 1, %s28
      %s38 = scalar_select %p35, %s37, %s28
      %p39 = scmp.ge.s32.totalorder %s38, 2
      %s40 = scalar_select %p39, 0, %s38
      %s41 = ssub.s32 %s28, %s40
      %s42 = ssub.s32 %s29, %s36
      %s43 = sor.u32 %s41, %s42
      %p44 = scmp.eq.s32.totalorder %s43, 0
      %s46 = sadd.s32 %s45, 1
      %s47 = scalar_select %p44, %s45, %s46
      %p50 = pneg %p44
      %p51 = scmp.eq.s32.totalorder %s21, 1
      %p52 = por %p50, %p51
      %p53 = scmp.ne.s32.totalorder %s45, %s48
      %p54 = scmp.eq.s32.totalorder %s21, 0
      %p55 = por %p53, %p54
      %p56 = scmp.ne.s32.totalorder %s45, %s48
      %p57 = scmp.eq.s32.totalorder %s26, 1
      %p58 = por %p56, %p57
      %p59 = scmp.ne.s32.totalorder %s48, %s49
      %p60 = scmp.eq.s32.totalorder %s26, 0
      %p61 = por %p59, %p60
      %p62 = scmp.ne.s32.totalorder %s48, %s49
      %p63 = scmp.eq.s32.totalorder %s27, 1
      %p64 = por %p62, %p63
      %p66 = scmp.ne.s32.totalorder %s49, %s65
      %p67 = scmp.eq.s32.totalorder %s27, 0
      %p68 = por %p66, %p67
      %s69 = ssub.s32 %s28, %s40
      %p70 = scmp.eq.s32.totalorder %s69, 0
      %s72 = sadd.s32 %s71, 1
      %s73 = scalar_select %p70, %s71, %s72
      %p76 = pneg %p70
      %p77 = scmp.eq.s32.totalorder %s21, 1
      %p78 = por %p76, %p77
      %p79 = scmp.ne.s32.totalorder %s71, %s74
      %p80 = scmp.eq.s32.totalorder %s21, 0
      %p81 = por %p79, %p80
      %p82 = scmp.ne.s32.totalorder %s71, %s74
      %p83 = scmp.eq.s32.totalorder %s26, 1
      %p84 = por %p82, %p83
      %p85 = scmp.ne.s32.totalorder %s74, %s75
      %p86 = scmp.eq.s32.totalorder %s26, 0
      %p87 = por %p85, %p86
      %p88 = scmp.ne.s32.totalorder %s74, %s75
      %p89 = scmp.eq.s32.totalorder %s27, 1
      %p90 = por %p88, %p89
      %p92 = scmp.ne.s32.totalorder %s75, %s91
      %p93 = scmp.eq.s32.totalorder %s27, 0
      %p94 = por %p92, %p93
      %s95 = ssub.s32 %s28, %s40
      %p96 = scmp.eq.s32.totalorder %s95, 0
      %s98 = sadd.s32 %s97, 1
      %s99 = scalar_select %p96, %s97, %s98
      %p102 = pneg %p96
      %p103 = scmp.eq.s32.totalorder %s21, 1
      %p104 = por %p102, %p103
      %p105 = scmp.ne.s32.totalorder %s97, %s100
      %p106 = scmp.eq.s32.totalorder %s21, 0
      %p107 = por %p105, %p106
      %p108 = scmp.ne.s32.totalorder %s97, %s100
      %p109 = scmp.eq.s32.totalorder %s26, 1
      %p110 = por %p108, %p109
      %p111 = scmp.ne.s32.totalorder %s100, %s101
      %p112 = scmp.eq.s32.totalorder %s26, 0
      %p113 = por %p111, %p112
      %p114 = scmp.ne.s32.totalorder %s100, %s101
      %p115 = scmp.eq.s32.totalorder %s27, 1
      %p116 = por %p114, %p115
      %p118 = scmp.ne.s32.totalorder %s101, %s117
      %p119 = scmp.eq.s32.totalorder %s27, 0
      %p120 = por %p118, %p119
      %s122 = sadd.s32 %s121, 1
      %p125 = scmp.eq.s32.totalorder %s21, 1
      %p126 = scmp.ne.s32.totalorder %s121, %s123
      %p127 = scmp.eq.s32.totalorder %s21, 0
      %p128 = por %p126, %p127
      %p129 = scmp.ne.s32.totalorder %s121, %s123
      %p130 = scmp.eq.s32.totalorder %s26, 1
      %p131 = por %p129, %p130
      %p132 = scmp.ne.s32.totalorder %s123, %s124
      %p133 = scmp.eq.s32.totalorder %s26, 0
      %p134 = por %p132, %p133
      %p135 = scmp.ne.s32.totalorder %s123, %s124
      %p136 = scmp.eq.s32.totalorder %s27, 1
      %p137 = por %p135, %p136
      %p139 = scmp.ne.s32.totalorder %s124, %s138
      %p140 = scmp.eq.s32.totalorder %s27, 0
      %p141 = por %p139, %p140
      %s143 = sadd.s32 %s142, 1
      %p146 = scmp.eq.s32.totalorder %s21, 1
      %p147 = scmp.ne.s32.totalorder %s142, %s144
      %p148 = scmp.eq.s32.totalorder %s21, 0
      %p149 = por %p147, %p148
      %p150 = scmp.ne.s32.totalorder %s142, %s144
      %p151 = scmp.eq.s32.totalorder %s26, 1
      %p152 = por %p150, %p151
      %p153 = scmp.ne.s32.totalorder %s144, %s145
      %p154 = scmp.eq.s32.totalorder %s26, 0
      %p155 = por %p153, %p154
      %p156 = scmp.ne.s32.totalorder %s144, %s145
      %p157 = scmp.eq.s32.totalorder %s27, 1
      %p158 = por %p156, %p157
      %p160 = scmp.ne.s32.totalorder %s145, %s159
      %p161 = scmp.eq.s32.totalorder %s27, 0
      %p162 = por %p160, %p161
      %s163 = ssub.s32 %s28, %s40
      %s164 = ssub.s32 %s29, %s36
      %s165 = sor.u32 %s163, %s164
      %p166 = scmp.eq.s32.totalorder %s165, 0
      %s168 = sadd.s32 %s167, 1
      %s169 = scalar_select %p166, %s167, %s168
      %p172 = pneg %p166
      %p173 = scmp.eq.s32.totalorder %s21, 1
      %p174 = por %p172, %p173
      %p175 = scmp.ne.s32.totalorder %s167, %s170
      %p176 = scmp.eq.s32.totalorder %s21, 0
      %p177 = por %p175, %p176
      %p178 = scmp.ne.s32.totalorder %s167, %s170
      %p179 = scmp.eq.s32.totalorder %s26, 1
      %p180 = por %p178, %p179
      %p181 = scmp.ne.s32.totalorder %s170, %s171
      %p182 = scmp.eq.s32.totalorder %s26, 0
      %p183 = por %p181, %p182
      %p184 = scmp.ne.s32.totalorder %s170, %s171
      %p185 = scmp.eq.s32.totalorder %s27, 1
      %p186 = por %p184, %p185
      %p188 = scmp.ne.s32.totalorder %s171, %s187
      %p189 = scmp.eq.s32.totalorder %s27, 0
      %p190 = por %p188, %p189
      %p191 = scmp.le.s32.totalorder 1, %s21
      %p192 = scmp.lt.s32.totalorder %s21, 3
      %p193 = pnand %p191, %p192
      %p194 = pneg %p193
      // Predicated region
      $region9: #{tpu_custom_call.1} parent=5 // pred_check
        _
      $region10: #{tpu_custom_call.1} parent=5 // pred_check_branch
        %196 = sbr.rel (%p193) target = $region12
      $region11: #{tpu_custom_call.1} parent=5 // pred_region
        %s197 = ssub.s32 %s21, 1
        // Predicated region
        $region13: #{tpu_custom_call.1} parent=11 // pred_check
          %p198 = pneg %p134
        $region14: #{tpu_custom_call.1} parent=11 // pred_check_branch
          %200 = sbr.rel (%p198) target = $region16
        $region15: #{tpu_custom_call.1} parent=11 // pred_region
          %s202 = ssub.s32 1024, 1024
          %203 = vsyncadd [#allocation10], %s202
          %s204 = sshll.u32 [#allocation9], 4
          %s205 = int_to_ptr.vmem [resolvable:$true] %s204
          %210 = dma.hbm_to_vmem [thread:$0]  %s3, 1024, %s205, [#allocation10], 128, 128, 8
        $region16: #{tpu_custom_call.1} parent=11 // pred_fallthru
          _
        // Predicated region
        $region17: #{tpu_custom_call.1} parent=11 // pred_check
          %p211 = pneg %p155
        $region18: #{tpu_custom_call.1} parent=11 // pred_check_branch
          %213 = sbr.rel (%p211) target = $region20
        $region19: #{tpu_custom_call.1} parent=11 // pred_region
          _
        $region20: #{tpu_custom_call.1} parent=11 // pred_fallthru
          _
      $region12: #{tpu_custom_call.1} parent=5 // pred_fallthru
        _
      %p214 = scmp.lt.s32.totalorder %s21, 2
      // Predicated region
      $region21: #{tpu_custom_call.1} parent=5 // pred_check
        %p215 = pneg %p214
      $region22: #{tpu_custom_call.1} parent=5 // pred_check_branch
        %217 = sbr.rel (%p215) target = $region24
      $region23: #{tpu_custom_call.1} parent=5 // pred_region
        // Predicated region
        $region25: #{tpu_custom_call.1} parent=23 // pred_check
          %p218 = pneg %p55
        $region26: #{tpu_custom_call.1} parent=23 // pred_check_branch
          %220 = sbr.rel (%p218) target = $region28
        $region27: #{tpu_custom_call.1} parent=23 // pred_region
          %s221 = sand.u32 %s45, 1
          %s222 = scalar_lea.sflag [#allocation4], %s221
          %s223 = sand.u32 %s45, 1
          %s224 = smul.addr %s223, 64
          %s225 = scalar_lea.vmem [#allocation3], %s224
          %s226 = smul.u32 2, %s29
          %s228 = ssub.s32 1024, 1024
          %229 = vsyncadd %s222, %s228
          %s230 = smul.addr %s28, 8
          %s231 = sadd.s32 %s226, %s230
          %s232 = smul.addr %s231, 128
          %s233 = scalar_lea.hbm %s0, %s232
          %s234 = sshll.u32 %s225, 4
          %s235 = int_to_ptr.vmem [resolvable:$true] %s234
          %240 = dma.hbm_to_vmem [thread:$0]  %s233, 1024, %s235, %s222, 128, 128, 8
        $region28: #{tpu_custom_call.1} parent=23 // pred_fallthru
          _
        // Predicated region
        $region29: #{tpu_custom_call.1} parent=23 // pred_check
          %p241 = pneg %p81
        $region30: #{tpu_custom_call.1} parent=23 // pred_check_branch
          %243 = sbr.rel (%p241) target = $region32
        $region31: #{tpu_custom_call.1} parent=23 // pred_region
          %s244 = sand.u32 %s21, 1
          %s245 = scalar_lea.sflag [#allocation7], %s244
          %s246 = sand.u32 %s71, 1
          %s247 = smul.addr %s246, 64
          %s248 = scalar_lea.vmem [#allocation6], %s247
          %s250 = ssub.s32 1024, 1024
          %251 = vsyncadd %s245, %s250
          %s252 = smul.addr %s28, 8
          %s253 = smul.addr %s252, 128
          %s254 = scalar_lea.hbm %s1, %s253
          %s255 = sshll.u32 %s248, 4
          %s256 = int_to_ptr.vmem [resolvable:$true] %s255
          %261 = dma.hbm_to_vmem [thread:$0]  %s254, 1024, %s256, %s245, 128, 128, 8
        $region32: #{tpu_custom_call.1} parent=23 // pred_fallthru
          _
        // Predicated region
        $region33: #{tpu_custom_call.1} parent=23 // pred_check
          %p262 = pneg %p107
        $region34: #{tpu_custom_call.1} parent=23 // pred_check_branch
          %264 = sbr.rel (%p262) target = $region36
        $region35: #{tpu_custom_call.1} parent=23 // pred_region
          %s265 = sand.u32 %s21, 1
          %s266 = scalar_lea.sflag [#allocation7], %s265
          %s267 = sand.u32 %s97, 1
          %s268 = smul.addr %s267, 64
          %s269 = scalar_lea.vmem [#allocation8], %s268
          %s271 = ssub.s32 1024, 1024
          %272 = vsyncadd %s266, %s271
          %s273 = smul.addr %s28, 8
          %s274 = smul.addr %s273, 128
          %s275 = scalar_lea.hbm %s2, %s274
          %s276 = sshll.u32 %s269, 4
          %s277 = int_to_ptr.vmem [resolvable:$true] %s276
          %282 = dma.hbm_to_vmem [thread:$0]  %s275, 1024, %s277, %s266, 128, 128, 8
        $region36: #{tpu_custom_call.1} parent=23 // pred_fallthru
          _
      $region24: #{tpu_custom_call.1} parent=5 // pred_fallthru
        _
      %p283 = scmp.le.s32.totalorder 1, %s21
      %p284 = scmp.lt.s32.totalorder %s21, 3
      %p285 = pnand %p283, %p284
      %p286 = pneg %p285
      // Predicated region
      $region37: #{tpu_custom_call.1} parent=5 // pred_check
        _
      $region38: #{tpu_custom_call.1} parent=5 // pred_check_branch
        %288 = sbr.rel (%p285) target = $region40
      $region39: #{tpu_custom_call.1} parent=5 // pred_region
        %s289 = ssub.s32 %s21, 1
        %s290 = sand.u32 %s48, 1
        %s291 = scalar_lea.sflag [#allocation4], %s290
        %s292 = sand.u32 %s48, 1
        %s293 = smul.addr %s292, 64
        %s294 = scalar_lea.vmem [#allocation3], %s293
        // Predicated region
        $region41: #{tpu_custom_call.1} parent=39 // pred_check
          %p295 = pneg %p61
        $region42: #{tpu_custom_call.1} parent=39 // pred_check_branch
          %297 = sbr.rel (%p295) target = $region44
        $region43: #{tpu_custom_call.1} parent=39 // pred_region
          %298 = dma.done %s291, 1024
        $region44: #{tpu_custom_call.1} parent=39 // pred_fallthru
          _
        %s299 = sand.u32 %s26, 1
        %s300 = scalar_lea.sflag [#allocation7], %s299
        %s301 = sand.u32 %s74, 1
        %s302 = smul.addr %s301, 64
        %s303 = scalar_lea.vmem [#allocation6], %s302
        // Predicated region
        $region45: #{tpu_custom_call.1} parent=39 // pred_check
          %p304 = pneg %p87
        $region46: #{tpu_custom_call.1} parent=39 // pred_check_branch
          %306 = sbr.rel (%p304) target = $region48
        $region47: #{tpu_custom_call.1} parent=39 // pred_region
          %307 = dma.done %s300, 1024
        $region48: #{tpu_custom_call.1} parent=39 // pred_fallthru
          _
        %s308 = sand.u32 %s26, 1
        %s309 = scalar_lea.sflag [#allocation7], %s308
        %s310 = sand.u32 %s100, 1
        %s311 = smul.addr %s310, 64
        %s312 = scalar_lea.vmem [#allocation8], %s311
        // Predicated region
        $region49: #{tpu_custom_call.1} parent=39 // pred_check
          %p313 = pneg %p113
        $region50: #{tpu_custom_call.1} parent=39 // pred_check_branch
          %315 = sbr.rel (%p313) target = $region52
        $region51: #{tpu_custom_call.1} parent=39 // pred_region
          %316 = dma.done %s309, 1024
        $region52: #{tpu_custom_call.1} parent=39 // pred_fallthru
          _
        // Predicated region
        $region53: #{tpu_custom_call.1} parent=39 // pred_check
          %p317 = pneg %p134
        $region54: #{tpu_custom_call.1} parent=39 // pred_check_branch
          %319 = sbr.rel (%p317) target = $region56
        $region55: #{tpu_custom_call.1} parent=39 // pred_region
          %320 = dma.done [#allocation10], 1024
        $region56: #{tpu_custom_call.1} parent=39 // pred_fallthru
          _
        %s321 = sand.u32 %s48, 1
        %s322 = scalar_lea.sflag [#allocation4], %s321
        %s323 = sand.u32 %s48, 1
        %s324 = smul.addr %s323, 64
        %s325 = scalar_lea.vmem [#allocation3], %s324
        %p326 = pneg %p61
        %p327 = pneg %p58
        %s328 = sand.u32 %s26, 1
        %s329 = scalar_lea.sflag [#allocation7], %s328
        %s330 = sand.u32 %s74, 1
        %s331 = smul.addr %s330, 64
        %s332 = scalar_lea.vmem [#allocation6], %s331
        %p333 = pneg %p87
        %p334 = pneg %p84
        %s335 = sand.u32 %s26, 1
        %s336 = scalar_lea.sflag [#allocation7], %s335
        %s337 = sand.u32 %s100, 1
        %s338 = smul.addr %s337, 64
        %s339 = scalar_lea.vmem [#allocation8], %s338
        %p340 = pneg %p113
        %p341 = pneg %p110
        %p342 = pneg %p134
        %p343 = pneg %p131
        %p344 = pneg %p155
        %p345 = pneg %p152
        %p346 = pneg %p183
        %p347 = pneg %p180
        %s348 = sand.u32 %s170, 1
        %s349 = scalar_lea.sflag [#allocation5], %s348
        %s350 = sand.u32 %s170, 1
        %s351 = smul.addr %s350, 16
        %s352 = scalar_lea.vmem [#allocation11], %s351
        %s353 = smul.u32 2, %s31
        %s354 = smul.u32 2, %s31
        %v355 = vld [vmem:[%s294] sm:$0xff]
        %v356 = vld [vmem:[%s294 + $0x8] sm:$0xff]
        %v357 = vld [vmem:[%s303] sm:$0xff]
        %v358 = vld [vmem:[%s303 + $0x8] sm:$0xff]
        %v359 = vld [vmem:[%s312] sm:$0xff]
        %v360 = vld [vmem:[%s312 + $0x8] sm:$0xff]
        %vm361 = vcmask 130048
        %v363 = vsel %vm361, %v355, 0
        %v366 = vsel %vm361, %v356, 0
        %368 = vmatprep.subr.mxu0 0.0
        %369 = vmatpush1.msra.mxu0 0.0
        %370 = vmatprep.subr.mxu0 0.0
        %371 = vmatpush1.msra.mxu0 0.0
        %372 = vmatprep.subr.mxu0 0.0
        %373 = vmatpush1.msra.mxu0 0.0
        %374 = vmatprep.subr.mxu0 0.0
        %375 = vmatpush1.msra.mxu0 0.0
        %376 = vmatprep.subr.mxu0 0.0
        %377 = vmatpush1.msra.mxu0 0.0
        %378 = vmatprep.subr.mxu0 0.0
        %379 = vmatpush1.msra.mxu0 0.0
        %380 = vmatprep.subr.mxu0 0.0
        %381 = vmatpush1.msra.mxu0 0.0
        %382 = vmatprep.subr.mxu0 0.0
        %383 = vmatpush1.msra.mxu0 0.0
        %384 = vmatprep.subr.mxu0 0.0
        %385 = vmatpush1.msra.mxu0 0.0
        %386 = vmatprep.subr.mxu0 0.0
        %387 = vmatpush1.msra.mxu0 0.0
        %388 = vmatprep.subr.mxu0 0.0
        %389 = vmatpush1.msra.mxu0 0.0
        %390 = vmatprep.subr.mxu0 0.0
        %391 = vmatpush1.msra.mxu0 0.0
        %392 = vmatprep.subr.mxu0 0.0
        %393 = vmatpush1.msra.mxu0 0.0
        %394 = vmatprep.subr.mxu0 0.0
        %395 = vmatpush1.msra.mxu0 0.0
        %396 = vmatprep.subr.mxu0 0.0
        %397 = vmatpush1.msra.mxu0 %v358
        %398 = vmatprep.subr.mxu0 0.0
        %399 = vmatpush1.msra.mxu0 %v357
        %400 = vmatprep.subr.mxu0 0.0
        %401 = vmatpush2.msra.mxu0 0.0
        %402 = vmatprep.subr.mxu0 0.0
        %403 = vmatpush2.msra.mxu0 0.0
        %404 = vmatprep.subr.mxu0 0.0
        %405 = vmatpush2.msra.mxu0 0.0
        %406 = vmatprep.subr.mxu0 0.0
        %407 = vmatpush2.msra.mxu0 0.0
        %408 = vmatprep.subr.mxu0 0.0
        %409 = vmatpush2.msra.mxu0 0.0
        %410 = vmatprep.subr.mxu0 0.0
        %411 = vmatpush2.msra.mxu0 0.0
        %412 = vmatprep.subr.mxu0 0.0
        %413 = vmatpush2.msra.mxu0 0.0
        %414 = vmatprep.subr.mxu0 0.0
        %415 = vmatpush2.msra.mxu0 0.0
        %416 = vmatprep.subr.mxu0 0.0
        %417 = vmatpush2.msra.mxu0 0.0
        %418 = vmatprep.subr.mxu0 0.0
        %419 = vmatpush2.msra.mxu0 0.0
        %420 = vmatprep.subr.mxu0 0.0
        %421 = vmatpush2.msra.mxu0 0.0
        %422 = vmatprep.subr.mxu0 0.0
        %423 = vmatpush2.msra.mxu0 0.0
        %424 = vmatprep.subr.mxu0 0.0
        %425 = vmatpush2.msra.mxu0 0.0
        %426 = vmatprep.subr.mxu0 0.0
        %427 = vmatpush2.msra.mxu0 0.0
        %428 = vmatprep.subr.mxu0 0.0
        %429 = vmatpush2.msra.mxu0 0.0
        %430 = vmatprep.subr.mxu0 0.0
        %431 = vmatpush2.msra.mxu0 0.0
        %432 = vmatprep.mubr.f32.mxu0 0.0
        %433 = vmatmul.mubr.f32.gmra.mxu0 %v363
        %v434 = vpop.f32.mrf.mxu0
        %v435 = vadd.f32 0.0, %v434
        %v436 = vpop.f32.mrf.mxu0
        %437 = vmatprep.mubr.f32.mxu0 0.0
        %438 = vmatmul.mubr.f32.gmra.mxu0 %v366
        %v439 = vpop.f32.mrf.mxu0
        %v440 = vadd.f32 0.0, %v439
        %v441 = vpop.f32.mrf.mxu0
        %442 = vdwg.mxu0
        %v443 = vsel %vm361, %v435, -inf
        %444 = vmax.xlane.f32.xlu0 %v443
        %v445 = vpop.xlane.xlu0 %444
        %v446 = vsel %vm361, %v440, -inf
        %447 = vmax.xlane.f32.xlu0 %v446
        %v448 = vpop.xlane.xlu0 %447
        %v449 = vsub.f32 %v435, %v445
        %v450 = vsub.f32 %v440, %v448
        %v451 = vmul.f32 %v449, 1.442695
        %v452 = vpow.pop %v451
        %v453 = vmul.f32 %v450, 1.442695
        %v454 = vpow.pop %v453
        %v455 = vsel %vm361, %v452, 0.0
        %456 = vadd.xlane.f32.xlu0 %v455
        %v457 = vpop.xlane.xlu0 %456
        %v458 = vsel %vm361, %v454, 0.0
        %459 = vadd.xlane.f32.xlu0 %v458
        %v460 = vpop.xlane.xlu0 %459
        %v462 = vsel %vm361, %v452, 0
        %v465 = vsel %vm361, %v454, 0
        %467 = vmatprep.subr.mxu0 0.0
        %468 = vmatpush1.msra.mxu0 0.0
        %469 = vmatprep.subr.mxu0 0.0
        %470 = vmatpush1.msra.mxu0 0.0
        %471 = vmatprep.subr.mxu0 0.0
        %472 = vmatpush1.msra.mxu0 0.0
        %473 = vmatprep.subr.mxu0 0.0
        %474 = vmatpush1.msra.mxu0 0.0
        %475 = vmatprep.subr.mxu0 0.0
        %476 = vmatpush1.msra.mxu0 0.0
        %477 = vmatprep.subr.mxu0 0.0
        %478 = vmatpush1.msra.mxu0 0.0
        %479 = vmatprep.subr.mxu0 0.0
        %480 = vmatpush1.msra.mxu0 0.0
        %481 = vmatprep.subr.mxu0 0.0
        %482 = vmatpush1.msra.mxu0 0.0
        %483 = vmatprep.subr.mxu0 0.0
        %484 = vmatpush1.msra.mxu0 0.0
        %485 = vmatprep.subr.mxu0 0.0
        %486 = vmatpush1.msra.mxu0 0.0
        %487 = vmatprep.subr.mxu0 0.0
        %488 = vmatpush1.msra.mxu0 0.0
        %489 = vmatprep.subr.mxu0 0.0
        %490 = vmatpush1.msra.mxu0 0.0
        %491 = vmatprep.subr.mxu0 0.0
        %492 = vmatpush1.msra.mxu0 0.0
        %493 = vmatprep.subr.mxu0 0.0
        %494 = vmatpush1.msra.mxu0 0.0
        %495 = vmatprep.subr.mxu0 0.0
        %496 = vmatpush1.msra.mxu0 %v360
        %497 = vmatprep.subr.mxu0 0.0
        %498 = vmatpush1.msra.mxu0 %v359
        %499 = vmatprep.subr.mxu0 0.0
        %500 = vmatpush2.msra.mxu0 0.0
        %501 = vmatprep.subr.mxu0 0.0
        %502 = vmatpush2.msra.mxu0 0.0
        %503 = vmatprep.subr.mxu0 0.0
        %504 = vmatpush2.msra.mxu0 0.0
        %505 = vmatprep.subr.mxu0 0.0
        %506 = vmatpush2.msra.mxu0 0.0
        %507 = vmatprep.subr.mxu0 0.0
        %508 = vmatpush2.msra.mxu0 0.0
        %509 = vmatprep.subr.mxu0 0.0
        %510 = vmatpush2.msra.mxu0 0.0
        %511 = vmatprep.subr.mxu0 0.0
        %512 = vmatpush2.msra.mxu0 0.0
        %513 = vmatprep.subr.mxu0 0.0
        %514 = vmatpush2.msra.mxu0 0.0
        %515 = vmatprep.subr.mxu0 0.0
        %516 = vmatpush2.msra.mxu0 0.0
        %517 = vmatprep.subr.mxu0 0.0
        %518 = vmatpush2.msra.mxu0 0.0
        %519 = vmatprep.subr.mxu0 0.0
        %520 = vmatpush2.msra.mxu0 0.0
        %521 = vmatprep.subr.mxu0 0.0
        %522 = vmatpush2.msra.mxu0 0.0
        %523 = vmatprep.subr.mxu0 0.0
        %524 = vmatpush2.msra.mxu0 0.0
        %525 = vmatprep.subr.mxu0 0.0
        %526 = vmatpush2.msra.mxu0 0.0
        %527 = vmatprep.subr.mxu0 0.0
        %528 = vmatpush2.msra.mxu0 0.0
        %529 = vmatprep.subr.mxu0 0.0
        %530 = vmatpush2.msra.mxu0 0.0
        %531 = vmatprep.mubr.f32.mxu0 0.0
        %532 = vmatmul.mubr.f32.gmra.mxu0 %v462
        %v533 = vpop.f32.mrf.mxu0
        %v534 = vadd.f32 0.0, %v533
        %v535 = vpop.f32.mrf.mxu0
        %536 = vmatprep.mubr.f32.mxu0 0.0
        %537 = vmatmul.mubr.f32.gmra.mxu0 %v465
        %v538 = vpop.f32.mrf.mxu0
        %v539 = vadd.f32 0.0, %v538
        %v540 = vpop.f32.mrf.mxu0
        %541 = vdwg.mxu0
        %v542 = vrcp.pop %v457
        %v543 = vrcp.pop %v460
        %v544 = vmul.f32 %v534, %v542
        %v545 = vmul.f32 %v539, %v543
        %546 = vst.msk [vmem:[#allocation2] sm:$0xff] %vm361, %v544
        %547 = vst.msk [vmem:[#allocation2 + $0x8] sm:$0xff] %vm361, %v545
        %s548 = scalar_lea.vmem %s294, 16 [#allocation3]
        %v549 = vld [vmem:[%s548] sm:$0xff]
        %v550 = vld [vmem:[%s548 + $0x8] sm:$0xff]
        %s551 = scalar_lea.vmem %s303, 16 [#allocation6]
        %v552 = vld [vmem:[%s551] sm:$0xff]
        %v553 = vld [vmem:[%s551 + $0x8] sm:$0xff]
        %s554 = scalar_lea.vmem %s312, 16 [#allocation8]
        %v555 = vld [vmem:[%s554] sm:$0xff]
        %v556 = vld [vmem:[%s554 + $0x8] sm:$0xff]
        %v558 = vsel %vm361, %v549, 0
        %v561 = vsel %vm361, %v550, 0
        %563 = vmatprep.subr.mxu0 0.0
        %564 = vmatpush1.msra.mxu0 0.0
        %565 = vmatprep.subr.mxu0 0.0
        %566 = vmatpush1.msra.mxu0 0.0
        %567 = vmatprep.subr.mxu0 0.0
        %568 = vmatpush1.msra.mxu0 0.0
        %569 = vmatprep.subr.mxu0 0.0
        %570 = vmatpush1.msra.mxu0 0.0
        %571 = vmatprep.subr.mxu0 0.0
        %572 = vmatpush1.msra.mxu0 0.0
        %573 = vmatprep.subr.mxu0 0.0
        %574 = vmatpush1.msra.mxu0 0.0
        %575 = vmatprep.subr.mxu0 0.0
        %576 = vmatpush1.msra.mxu0 0.0
        %577 = vmatprep.subr.mxu0 0.0
        %578 = vmatpush1.msra.mxu0 0.0
        %579 = vmatprep.subr.mxu0 0.0
        %580 = vmatpush1.msra.mxu0 0.0
        %581 = vmatprep.subr.mxu0 0.0
        %582 = vmatpush1.msra.mxu0 0.0
        %583 = vmatprep.subr.mxu0 0.0
        %584 = vmatpush1.msra.mxu0 0.0
        %585 = vmatprep.subr.mxu0 0.0
        %586 = vmatpush1.msra.mxu0 0.0
        %587 = vmatprep.subr.mxu0 0.0
        %588 = vmatpush1.msra.mxu0 0.0
        %589 = vmatprep.subr.mxu0 0.0
        %590 = vmatpush1.msra.mxu0 0.0
        %591 = vmatprep.subr.mxu0 0.0
        %592 = vmatpush1.msra.mxu0 %v553
        %593 = vmatprep.subr.mxu0 0.0
        %594 = vmatpush1.msra.mxu0 %v552
        %595 = vmatprep.subr.mxu0 0.0
        %596 = vmatpush2.msra.mxu0 0.0
        %597 = vmatprep.subr.mxu0 0.0
        %598 = vmatpush2.msra.mxu0 0.0
        %599 = vmatprep.subr.mxu0 0.0
        %600 = vmatpush2.msra.mxu0 0.0
        %601 = vmatprep.subr.mxu0 0.0
        %602 = vmatpush2.msra.mxu0 0.0
        %603 = vmatprep.subr.mxu0 0.0
        %604 = vmatpush2.msra.mxu0 0.0
        %605 = vmatprep.subr.mxu0 0.0
        %606 = vmatpush2.msra.mxu0 0.0
        %607 = vmatprep.subr.mxu0 0.0
        %608 = vmatpush2.msra.mxu0 0.0
        %609 = vmatprep.subr.mxu0 0.0
        %610 = vmatpush2.msra.mxu0 0.0
        %611 = vmatprep.subr.mxu0 0.0
        %612 = vmatpush2.msra.mxu0 0.0
        %613 = vmatprep.subr.mxu0 0.0
        %614 = vmatpush2.msra.mxu0 0.0
        %615 = vmatprep.subr.mxu0 0.0
        %616 = vmatpush2.msra.mxu0 0.0
        %617 = vmatprep.subr.mxu0 0.0
        %618 = vmatpush2.msra.mxu0 0.0
        %619 = vmatprep.subr.mxu0 0.0
        %620 = vmatpush2.msra.mxu0 0.0
        %621 = vmatprep.subr.mxu0 0.0
        %622 = vmatpush2.msra.mxu0 0.0
        %623 = vmatprep.subr.mxu0 0.0
        %624 = vmatpush2.msra.mxu0 0.0
        %625 = vmatprep.subr.mxu0 0.0
        %626 = vmatpush2.msra.mxu0 0.0
        %627 = vmatprep.mubr.f32.mxu0 0.0
        %628 = vmatmul.mubr.f32.gmra.mxu0 %v558
        %v629 = vpop.f32.mrf.mxu0
        %v630 = vadd.f32 0.0, %v629
        %v631 = vpop.f32.mrf.mxu0
        %632 = vmatprep.mubr.f32.mxu0 0.0
        %633 = vmatmul.mubr.f32.gmra.mxu0 %v561
        %v634 = vpop.f32.mrf.mxu0
        %v635 = vadd.f32 0.0, %v634
        %v636 = vpop.f32.mrf.mxu0
        %637 = vdwg.mxu0
        %v638 = vsel %vm361, %v630, -inf
        %639 = vmax.xlane.f32.xlu0 %v638
        %v640 = vpop.xlane.xlu0 %639
        %v641 = vsel %vm361, %v635, -inf
        %642 = vmax.xlane.f32.xlu0 %v641
        %v643 = vpop.xlane.xlu0 %642
        %v644 = vsub.f32 %v630, %v640
        %v645 = vsub.f32 %v635, %v643
        %v646 = vmul.f32 %v644, 1.442695
        %v647 = vpow.pop %v646
        %v648 = vmul.f32 %v645, 1.442695
        %v649 = vpow.pop %v648
        %v650 = vsel %vm361, %v647, 0.0
        %651 = vadd.xlane.f32.xlu0 %v650
        %v652 = vpop.xlane.xlu0 %651
        %v653 = vsel %vm361, %v649, 0.0
        %654 = vadd.xlane.f32.xlu0 %v653
        %v655 = vpop.xlane.xlu0 %654
        %v657 = vsel %vm361, %v647, 0
        %v660 = vsel %vm361, %v649, 0
        %662 = vmatprep.subr.mxu0 0.0
        %663 = vmatpush1.msra.mxu0 0.0
        %664 = vmatprep.subr.mxu0 0.0
        %665 = vmatpush1.msra.mxu0 0.0
        %666 = vmatprep.subr.mxu0 0.0
        %667 = vmatpush1.msra.mxu0 0.0
        %668 = vmatprep.subr.mxu0 0.0
        %669 = vmatpush1.msra.mxu0 0.0
        %670 = vmatprep.subr.mxu0 0.0
        %671 = vmatpush1.msra.mxu0 0.0
        %672 = vmatprep.subr.mxu0 0.0
        %673 = vmatpush1.msra.mxu0 0.0
        %674 = vmatprep.subr.mxu0 0.0
        %675 = vmatpush1.msra.mxu0 0.0
        %676 = vmatprep.subr.mxu0 0.0
        %677 = vmatpush1.msra.mxu0 0.0
        %678 = vmatprep.subr.mxu0 0.0
        %679 = vmatpush1.msra.mxu0 0.0
        %680 = vmatprep.subr.mxu0 0.0
        %681 = vmatpush1.msra.mxu0 0.0
        %682 = vmatprep.subr.mxu0 0.0
        %683 = vmatpush1.msra.mxu0 0.0
        %684 = vmatprep.subr.mxu0 0.0
        %685 = vmatpush1.msra.mxu0 0.0
        %686 = vmatprep.subr.mxu0 0.0
        %687 = vmatpush1.msra.mxu0 0.0
        %688 = vmatprep.subr.mxu0 0.0
        %689 = vmatpush1.msra.mxu0 0.0
        %690 = vmatprep.subr.mxu0 0.0
        %691 = vmatpush1.msra.mxu0 %v556
        %692 = vmatprep.subr.mxu0 0.0
        %693 = vmatpush1.msra.mxu0 %v555
        %694 = vmatprep.subr.mxu0 0.0
        %695 = vmatpush2.msra.mxu0 0.0
        %696 = vmatprep.subr.mxu0 0.0
        %697 = vmatpush2.msra.mxu0 0.0
        %698 = vmatprep.subr.mxu0 0.0
        %699 = vmatpush2.msra.mxu0 0.0
        %700 = vmatprep.subr.mxu0 0.0
        %701 = vmatpush2.msra.mxu0 0.0
        %702 = vmatprep.subr.mxu0 0.0
        %703 = vmatpush2.msra.mxu0 0.0
        %704 = vmatprep.subr.mxu0 0.0
        %705 = vmatpush2.msra.mxu0 0.0
        %706 = vmatprep.subr.mxu0 0.0
        %707 = vmatpush2.msra.mxu0 0.0
        %708 = vmatprep.subr.mxu0 0.0
        %709 = vmatpush2.msra.mxu0 0.0
        %710 = vmatprep.subr.mxu0 0.0
        %711 = vmatpush2.msra.mxu0 0.0
        %712 = vmatprep.subr.mxu0 0.0
        %713 = vmatpush2.msra.mxu0 0.0
        %714 = vmatprep.subr.mxu0 0.0
        %715 = vmatpush2.msra.mxu0 0.0
        %716 = vmatprep.subr.mxu0 0.0
        %717 = vmatpush2.msra.mxu0 0.0
        %718 = vmatprep.subr.mxu0 0.0
        %719 = vmatpush2.msra.mxu0 0.0
        %720 = vmatprep.subr.mxu0 0.0
        %721 = vmatpush2.msra.mxu0 0.0
        %722 = vmatprep.subr.mxu0 0.0
        %723 = vmatpush2.msra.mxu0 0.0
        %724 = vmatprep.subr.mxu0 0.0
        %725 = vmatpush2.msra.mxu0 0.0
        %726 = vmatprep.mubr.f32.mxu0 0.0
        %727 = vmatmul.mubr.f32.gmra.mxu0 %v657
        %v728 = vpop.f32.mrf.mxu0
        %v729 = vadd.f32 0.0, %v728
        %v730 = vpop.f32.mrf.mxu0
        %731 = vmatprep.mubr.f32.mxu0 0.0
        %732 = vmatmul.mubr.f32.gmra.mxu0 %v660
        %v733 = vpop.f32.mrf.mxu0
        %v734 = vadd.f32 0.0, %v733
        %v735 = vpop.f32.mrf.mxu0
        %736 = vdwg.mxu0
        %v737 = vrcp.pop %v652
        %v738 = vrcp.pop %v655
        %v739 = vmul.f32 %v729, %v737
        %v740 = vmul.f32 %v734, %v738
        %743 = vrot.lane.b32.xlu0 %v739, 16
        %v744 = vpop.permute.xlu0 %743
        %745 = vrot.lane.b32.xlu0 %v740, 16
        %v746 = vpop.permute.xlu0 %745
        %vm749 = vcmask 261248
        %750 = vst.msk [vmem:[#allocation2] sm:$0xff] %vm749, %v744
        %751 = vst.msk [vmem:[#allocation2 + $0x8] sm:$0xff] %vm749, %v746
        %s752 = scalar_lea.vmem %s294, 32 [#allocation3]
        %v753 = vld [vmem:[%s752] sm:$0xff]
        %v754 = vld [vmem:[%s752 + $0x8] sm:$0xff]
        %s755 = scalar_lea.vmem %s303, 32 [#allocation6]
        %v756 = vld [vmem:[%s755] sm:$0xff]
        %v757 = vld [vmem:[%s755 + $0x8] sm:$0xff]
        %s758 = scalar_lea.vmem %s312, 32 [#allocation8]
        %v759 = vld [vmem:[%s758] sm:$0xff]
        %v760 = vld [vmem:[%s758 + $0x8] sm:$0xff]
        %v762 = vsel %vm361, %v753, 0
        %v765 = vsel %vm361, %v754, 0
        %767 = vmatprep.subr.mxu0 0.0
        %768 = vmatpush1.msra.mxu0 0.0
        %769 = vmatprep.subr.mxu0 0.0
        %770 = vmatpush1.msra.mxu0 0.0
        %771 = vmatprep.subr.mxu0 0.0
        %772 = vmatpush1.msra.mxu0 0.0
        %773 = vmatprep.subr.mxu0 0.0
        %774 = vmatpush1.msra.mxu0 0.0
        %775 = vmatprep.subr.mxu0 0.0
        %776 = vmatpush1.msra.mxu0 0.0
        %777 = vmatprep.subr.mxu0 0.0
        %778 = vmatpush1.msra.mxu0 0.0
        %779 = vmatprep.subr.mxu0 0.0
        %780 = vmatpush1.msra.mxu0 0.0
        %781 = vmatprep.subr.mxu0 0.0
        %782 = vmatpush1.msra.mxu0 0.0
        %783 = vmatprep.subr.mxu0 0.0
        %784 = vmatpush1.msra.mxu0 0.0
        %785 = vmatprep.subr.mxu0 0.0
        %786 = vmatpush1.msra.mxu0 0.0
        %787 = vmatprep.subr.mxu0 0.0
        %788 = vmatpush1.msra.mxu0 0.0
        %789 = vmatprep.subr.mxu0 0.0
        %790 = vmatpush1.msra.mxu0 0.0
        %791 = vmatprep.subr.mxu0 0.0
        %792 = vmatpush1.msra.mxu0 0.0
        %793 = vmatprep.subr.mxu0 0.0
        %794 = vmatpush1.msra.mxu0 0.0
        %795 = vmatprep.subr.mxu0 0.0
        %796 = vmatpush1.msra.mxu0 %v757
        %797 = vmatprep.subr.mxu0 0.0
        %798 = vmatpush1.msra.mxu0 %v756
        %799 = vmatprep.subr.mxu0 0.0
        %800 = vmatpush2.msra.mxu0 0.0
        %801 = vmatprep.subr.mxu0 0.0
        %802 = vmatpush2.msra.mxu0 0.0
        %803 = vmatprep.subr.mxu0 0.0
        %804 = vmatpush2.msra.mxu0 0.0
        %805 = vmatprep.subr.mxu0 0.0
        %806 = vmatpush2.msra.mxu0 0.0
        %807 = vmatprep.subr.mxu0 0.0
        %808 = vmatpush2.msra.mxu0 0.0
        %809 = vmatprep.subr.mxu0 0.0
        %810 = vmatpush2.msra.mxu0 0.0
        %811 = vmatprep.subr.mxu0 0.0
        %812 = vmatpush2.msra.mxu0 0.0
        %813 = vmatprep.subr.mxu0 0.0
        %814 = vmatpush2.msra.mxu0 0.0
        %815 = vmatprep.subr.mxu0 0.0
        %816 = vmatpush2.msra.mxu0 0.0
        %817 = vmatprep.subr.mxu0 0.0
        %818 = vmatpush2.msra.mxu0 0.0
        %819 = vmatprep.subr.mxu0 0.0
        %820 = vmatpush2.msra.mxu0 0.0
        %821 = vmatprep.subr.mxu0 0.0
        %822 = vmatpush2.msra.mxu0 0.0
        %823 = vmatprep.subr.mxu0 0.0
        %824 = vmatpush2.msra.mxu0 0.0
        %825 = vmatprep.subr.mxu0 0.0
        %826 = vmatpush2.msra.mxu0 0.0
        %827 = vmatprep.subr.mxu0 0.0
        %828 = vmatpush2.msra.mxu0 0.0
        %829 = vmatprep.subr.mxu0 0.0
        %830 = vmatpush2.msra.mxu0 0.0
        %831 = vmatprep.mubr.f32.mxu0 0.0
        %832 = vmatmul.mubr.f32.gmra.mxu0 %v762
        %v833 = vpop.f32.mrf.mxu0
        %v834 = vadd.f32 0.0, %v833
        %v835 = vpop.f32.mrf.mxu0
        %836 = vmatprep.mubr.f32.mxu0 0.0
        %837 = vmatmul.mubr.f32.gmra.mxu0 %v765
        %v838 = vpop.f32.mrf.mxu0
        %v839 = vadd.f32 0.0, %v838
        %v840 = vpop.f32.mrf.mxu0
        %841 = vdwg.mxu0
        %v842 = vsel %vm361, %v834, -inf
        %843 = vmax.xlane.f32.xlu0 %v842
        %v844 = vpop.xlane.xlu0 %843
        %v845 = vsel %vm361, %v839, -inf
        %846 = vmax.xlane.f32.xlu0 %v845
        %v847 = vpop.xlane.xlu0 %846
        %v848 = vsub.f32 %v834, %v844
        %v849 = vsub.f32 %v839, %v847
        %v850 = vmul.f32 %v848, 1.442695
        %v851 = vpow.pop %v850
        %v852 = vmul.f32 %v849, 1.442695
        %v853 = vpow.pop %v852
        %v854 = vsel %vm361, %v851, 0.0
        %855 = vadd.xlane.f32.xlu0 %v854
        %v856 = vpop.xlane.xlu0 %855
        %v857 = vsel %vm361, %v853, 0.0
        %858 = vadd.xlane.f32.xlu0 %v857
        %v859 = vpop.xlane.xlu0 %858
        %v861 = vsel %vm361, %v851, 0
        %v864 = vsel %vm361, %v853, 0
        %866 = vmatprep.subr.mxu0 0.0
        %867 = vmatpush1.msra.mxu0 0.0
        %868 = vmatprep.subr.mxu0 0.0
        %869 = vmatpush1.msra.mxu0 0.0
        %870 = vmatprep.subr.mxu0 0.0
        %871 = vmatpush1.msra.mxu0 0.0
        %872 = vmatprep.subr.mxu0 0.0
        %873 = vmatpush1.msra.mxu0 0.0
        %874 = vmatprep.subr.mxu0 0.0
        %875 = vmatpush1.msra.mxu0 0.0
        %876 = vmatprep.subr.mxu0 0.0
        %877 = vmatpush1.msra.mxu0 0.0
        %878 = vmatprep.subr.mxu0 0.0
        %879 = vmatpush1.msra.mxu0 0.0
        %880 = vmatprep.subr.mxu0 0.0
        %881 = vmatpush1.msra.mxu0 0.0
        %882 = vmatprep.subr.mxu0 0.0
        %883 = vmatpush1.msra.mxu0 0.0
        %884 = vmatprep.subr.mxu0 0.0
        %885 = vmatpush1.msra.mxu0 0.0
        %886 = vmatprep.subr.mxu0 0.0
        %887 = vmatpush1.msra.mxu0 0.0
        %888 = vmatprep.subr.mxu0 0.0
        %889 = vmatpush1.msra.mxu0 0.0
        %890 = vmatprep.subr.mxu0 0.0
        %891 = vmatpush1.msra.mxu0 0.0
        %892 = vmatprep.subr.mxu0 0.0
        %893 = vmatpush1.msra.mxu0 0.0
        %894 = vmatprep.subr.mxu0 0.0
        %895 = vmatpush1.msra.mxu0 %v760
        %896 = vmatprep.subr.mxu0 0.0
        %897 = vmatpush1.msra.mxu0 %v759
        %898 = vmatprep.subr.mxu0 0.0
        %899 = vmatpush2.msra.mxu0 0.0
        %900 = vmatprep.subr.mxu0 0.0
        %901 = vmatpush2.msra.mxu0 0.0
        %902 = vmatprep.subr.mxu0 0.0
        %903 = vmatpush2.msra.mxu0 0.0
        %904 = vmatprep.subr.mxu0 0.0
        %905 = vmatpush2.msra.mxu0 0.0
        %906 = vmatprep.subr.mxu0 0.0
        %907 = vmatpush2.msra.mxu0 0.0
        %908 = vmatprep.subr.mxu0 0.0
        %909 = vmatpush2.msra.mxu0 0.0
        %910 = vmatprep.subr.mxu0 0.0
        %911 = vmatpush2.msra.mxu0 0.0
        %912 = vmatprep.subr.mxu0 0.0
        %913 = vmatpush2.msra.mxu0 0.0
        %914 = vmatprep.subr.mxu0 0.0
        %915 = vmatpush2.msra.mxu0 0.0
        %916 = vmatprep.subr.mxu0 0.0
        %917 = vmatpush2.msra.mxu0 0.0
        %918 = vmatprep.subr.mxu0 0.0
        %919 = vmatpush2.msra.mxu0 0.0
        %920 = vmatprep.subr.mxu0 0.0
        %921 = vmatpush2.msra.mxu0 0.0
        %922 = vmatprep.subr.mxu0 0.0
        %923 = vmatpush2.msra.mxu0 0.0
        %924 = vmatprep.subr.mxu0 0.0
        %925 = vmatpush2.msra.mxu0 0.0
        %926 = vmatprep.subr.mxu0 0.0
        %927 = vmatpush2.msra.mxu0 0.0
        %928 = vmatprep.subr.mxu0 0.0
        %929 = vmatpush2.msra.mxu0 0.0
        %930 = vmatprep.mubr.f32.mxu0 0.0
        %931 = vmatmul.mubr.f32.gmra.mxu0 %v861
        %v932 = vpop.f32.mrf.mxu0
        %v933 = vadd.f32 0.0, %v932
        %v934 = vpop.f32.mrf.mxu0
        %935 = vmatprep.mubr.f32.mxu0 0.0
        %936 = vmatmul.mubr.f32.gmra.mxu0 %v864
        %v937 = vpop.f32.mrf.mxu0
        %v938 = vadd.f32 0.0, %v937
        %v939 = vpop.f32.mrf.mxu0
        %940 = vdwg.mxu0
        %v941 = vrcp.pop %v856
        %v942 = vrcp.pop %v859
        %v943 = vmul.f32 %v933, %v941
        %v944 = vmul.f32 %v938, %v942
        %947 = vrot.lane.b32.xlu0 %v943, 32
        %v948 = vpop.permute.xlu0 %947
        %949 = vrot.lane.b32.xlu0 %v944, 32
        %v950 = vpop.permute.xlu0 %949
        %vm953 = vcmask 392448
        %954 = vst.msk [vmem:[#allocation2] sm:$0xff] %vm953, %v948
        %955 = vst.msk [vmem:[#allocation2 + $0x8] sm:$0xff] %vm953, %v950
        %s956 = scalar_lea.vmem %s294, 48 [#allocation3]
        %v957 = vld [vmem:[%s956] sm:$0xff]
        %v958 = vld [vmem:[%s956 + $0x8] sm:$0xff]
        %s959 = scalar_lea.vmem %s303, 48 [#allocation6]
        %v960 = vld [vmem:[%s959] sm:$0xff]
        %v961 = vld [vmem:[%s959 + $0x8] sm:$0xff]
        %s962 = scalar_lea.vmem %s312, 48 [#allocation8]
        %v963 = vld [vmem:[%s962] sm:$0xff]
        %v964 = vld [vmem:[%s962 + $0x8] sm:$0xff]
        %v966 = vsel %vm361, %v957, 0
        %v969 = vsel %vm361, %v958, 0
        %971 = vmatprep.subr.mxu0 0.0
        %972 = vmatpush1.msra.mxu0 0.0
        %973 = vmatprep.subr.mxu0 0.0
        %974 = vmatpush1.msra.mxu0 0.0
        %975 = vmatprep.subr.mxu0 0.0
        %976 = vmatpush1.msra.mxu0 0.0
        %977 = vmatprep.subr.mxu0 0.0
        %978 = vmatpush1.msra.mxu0 0.0
        %979 = vmatprep.subr.mxu0 0.0
        %980 = vmatpush1.msra.mxu0 0.0
        %981 = vmatprep.subr.mxu0 0.0
        %982 = vmatpush1.msra.mxu0 0.0
        %983 = vmatprep.subr.mxu0 0.0
        %984 = vmatpush1.msra.mxu0 0.0
        %985 = vmatprep.subr.mxu0 0.0
        %986 = vmatpush1.msra.mxu0 0.0
        %987 = vmatprep.subr.mxu0 0.0
        %988 = vmatpush1.msra.mxu0 0.0
        %989 = vmatprep.subr.mxu0 0.0
        %990 = vmatpush1.msra.mxu0 0.0
        %991 = vmatprep.subr.mxu0 0.0
        %992 = vmatpush1.msra.mxu0 0.0
        %993 = vmatprep.subr.mxu0 0.0
        %994 = vmatpush1.msra.mxu0 0.0
        %995 = vmatprep.subr.mxu0 0.0
        %996 = vmatpush1.msra.mxu0 0.0
        %997 = vmatprep.subr.mxu0 0.0
        %998 = vmatpush1.msra.mxu0 0.0
        %999 = vmatprep.subr.mxu0 0.0
        %1000 = vmatpush1.msra.mxu0 %v961
        %1001 = vmatprep.subr.mxu0 0.0
        %1002 = vmatpush1.msra.mxu0 %v960
        %1003 = vmatprep.subr.mxu0 0.0
        %1004 = vmatpush2.msra.mxu0 0.0
        %1005 = vmatprep.subr.mxu0 0.0
        %1006 = vmatpush2.msra.mxu0 0.0
        %1007 = vmatprep.subr.mxu0 0.0
        %1008 = vmatpush2.msra.mxu0 0.0
        %1009 = vmatprep.subr.mxu0 0.0
        %1010 = vmatpush2.msra.mxu0 0.0
        %1011 = vmatprep.subr.mxu0 0.0
        %1012 = vmatpush2.msra.mxu0 0.0
        %1013 = vmatprep.subr.mxu0 0.0
        %1014 = vmatpush2.msra.mxu0 0.0
        %1015 = vmatprep.subr.mxu0 0.0
        %1016 = vmatpush2.msra.mxu0 0.0
        %1017 = vmatprep.subr.mxu0 0.0
        %1018 = vmatpush2.msra.mxu0 0.0
        %1019 = vmatprep.subr.mxu0 0.0
        %1020 = vmatpush2.msra.mxu0 0.0
        %1021 = vmatprep.subr.mxu0 0.0
        %1022 = vmatpush2.msra.mxu0 0.0
        %1023 = vmatprep.subr.mxu0 0.0
        %1024 = vmatpush2.msra.mxu0 0.0
        %1025 = vmatprep.subr.mxu0 0.0
        %1026 = vmatpush2.msra.mxu0 0.0
        %1027 = vmatprep.subr.mxu0 0.0
        %1028 = vmatpush2.msra.mxu0 0.0
        %1029 = vmatprep.subr.mxu0 0.0
        %1030 = vmatpush2.msra.mxu0 0.0
        %1031 = vmatprep.subr.mxu0 0.0
        %1032 = vmatpush2.msra.mxu0 0.0
        %1033 = vmatprep.subr.mxu0 0.0
        %1034 = vmatpush2.msra.mxu0 0.0
        %1035 = vmatprep.mubr.f32.mxu0 0.0
        %1036 = vmatmul.mubr.f32.gmra.mxu0 %v966
        %v1037 = vpop.f32.mrf.mxu0
        %v1038 = vadd.f32 0.0, %v1037
        %v1039 = vpop.f32.mrf.mxu0
        %1040 = vmatprep.mubr.f32.mxu0 0.0
        %1041 = vmatmul.mubr.f32.gmra.mxu0 %v969
        %v1042 = vpop.f32.mrf.mxu0
        %v1043 = vadd.f32 0.0, %v1042
        %v1044 = vpop.f32.mrf.mxu0
        %1045 = vdwg.mxu0
        %v1046 = vsel %vm361, %v1038, -inf
        %1047 = vmax.xlane.f32.xlu0 %v1046
        %v1048 = vpop.xlane.xlu0 %1047
        %v1049 = vsel %vm361, %v1043, -inf
        %1050 = vmax.xlane.f32.xlu0 %v1049
        %v1051 = vpop.xlane.xlu0 %1050
        %v1052 = vsub.f32 %v1038, %v1048
        %v1053 = vsub.f32 %v1043, %v1051
        %v1054 = vmul.f32 %v1052, 1.442695
        %v1055 = vpow.pop %v1054
        %v1056 = vmul.f32 %v1053, 1.442695
        %v1057 = vpow.pop %v1056
        %v1058 = vsel %vm361, %v1055, 0.0
        %1059 = vadd.xlane.f32.xlu0 %v1058
        %v1060 = vpop.xlane.xlu0 %1059
        %v1061 = vsel %vm361, %v1057, 0.0
        %1062 = vadd.xlane.f32.xlu0 %v1061
        %v1063 = vpop.xlane.xlu0 %1062
        %v1065 = vsel %vm361, %v1055, 0
        %v1068 = vsel %vm361, %v1057, 0
        %1070 = vmatprep.subr.mxu0 0.0
        %1071 = vmatpush1.msra.mxu0 0.0
        %1072 = vmatprep.subr.mxu0 0.0
        %1073 = vmatpush1.msra.mxu0 0.0
        %1074 = vmatprep.subr.mxu0 0.0
        %1075 = vmatpush1.msra.mxu0 0.0
        %1076 = vmatprep.subr.mxu0 0.0
        %1077 = vmatpush1.msra.mxu0 0.0
        %1078 = vmatprep.subr.mxu0 0.0
        %1079 = vmatpush1.msra.mxu0 0.0
        %1080 = vmatprep.subr.mxu0 0.0
        %1081 = vmatpush1.msra.mxu0 0.0
        %1082 = vmatprep.subr.mxu0 0.0
        %1083 = vmatpush1.msra.mxu0 0.0
        %1084 = vmatprep.subr.mxu0 0.0
        %1085 = vmatpush1.msra.mxu0 0.0
        %1086 = vmatprep.subr.mxu0 0.0
        %1087 = vmatpush1.msra.mxu0 0.0
        %1088 = vmatprep.subr.mxu0 0.0
        %1089 = vmatpush1.msra.mxu0 0.0
        %1090 = vmatprep.subr.mxu0 0.0
        %1091 = vmatpush1.msra.mxu0 0.0
        %1092 = vmatprep.subr.mxu0 0.0
        %1093 = vmatpush1.msra.mxu0 0.0
        %1094 = vmatprep.subr.mxu0 0.0
        %1095 = vmatpush1.msra.mxu0 0.0
        %1096 = vmatprep.subr.mxu0 0.0
        %1097 = vmatpush1.msra.mxu0 0.0
        %1098 = vmatprep.subr.mxu0 0.0
        %1099 = vmatpush1.msra.mxu0 %v964
        %1100 = vmatprep.subr.mxu0 0.0
        %1101 = vmatpush1.msra.mxu0 %v963
        %1102 = vmatprep.subr.mxu0 0.0
        %1103 = vmatpush2.msra.mxu0 0.0
        %1104 = vmatprep.subr.mxu0 0.0
        %1105 = vmatpush2.msra.mxu0 0.0
        %1106 = vmatprep.subr.mxu0 0.0
        %1107 = vmatpush2.msra.mxu0 0.0
        %1108 = vmatprep.subr.mxu0 0.0
        %1109 = vmatpush2.msra.mxu0 0.0
        %1110 = vmatprep.subr.mxu0 0.0
        %1111 = vmatpush2.msra.mxu0 0.0
        %1112 = vmatprep.subr.mxu0 0.0
        %1113 = vmatpush2.msra.mxu0 0.0
        %1114 = vmatprep.subr.mxu0 0.0
        %1115 = vmatpush2.msra.mxu0 0.0
        %1116 = vmatprep.subr.mxu0 0.0
        %1117 = vmatpush2.msra.mxu0 0.0
        %1118 = vmatprep.subr.mxu0 0.0
        %1119 = vmatpush2.msra.mxu0 0.0
        %1120 = vmatprep.subr.mxu0 0.0
        %1121 = vmatpush2.msra.mxu0 0.0
        %1122 = vmatprep.subr.mxu0 0.0
        %1123 = vmatpush2.msra.mxu0 0.0
        %1124 = vmatprep.subr.mxu0 0.0
        %1125 = vmatpush2.msra.mxu0 0.0
        %1126 = vmatprep.subr.mxu0 0.0
        %1127 = vmatpush2.msra.mxu0 0.0
        %1128 = vmatprep.subr.mxu0 0.0
        %1129 = vmatpush2.msra.mxu0 0.0
        %1130 = vmatprep.subr.mxu0 0.0
        %1131 = vmatpush2.msra.mxu0 0.0
        %1132 = vmatprep.subr.mxu0 0.0
        %1133 = vmatpush2.msra.mxu0 0.0
        %1134 = vmatprep.mubr.f32.mxu0 0.0
        %1135 = vmatmul.mubr.f32.gmra.mxu0 %v1065
        %v1136 = vpop.f32.mrf.mxu0
        %v1137 = vadd.f32 0.0, %v1136
        %v1138 = vpop.f32.mrf.mxu0
        %1139 = vmatprep.mubr.f32.mxu0 0.0
        %1140 = vmatmul.mubr.f32.gmra.mxu0 %v1068
        %v1141 = vpop.f32.mrf.mxu0
        %v1142 = vadd.f32 0.0, %v1141
        %v1143 = vpop.f32.mrf.mxu0
        %1144 = vdwg.mxu0
        %v1145 = vrcp.pop %v1060
        %v1146 = vrcp.pop %v1063
        %v1147 = vmul.f32 %v1137, %v1145
        %v1148 = vmul.f32 %v1142, %v1146
        %1151 = vrot.lane.b32.xlu0 %v1147, 48
        %v1152 = vpop.permute.xlu0 %1151
        %1153 = vrot.lane.b32.xlu0 %v1148, 48
        %v1154 = vpop.permute.xlu0 %1153
        %vm1157 = vcmask 523648
        %1158 = vst.msk [vmem:[#allocation2] sm:$0xff] %vm1157, %v1152
        %1159 = vst.msk [vmem:[#allocation2 + $0x8] sm:$0xff] %vm1157, %v1154
        %v1160 = vld [vmem:[#allocation2] sm:$0xff]
        %v1161 = vld [vmem:[#allocation2 + $0x8] sm:$0xff]
        %v1162 = vld [vmem:[#allocation9] sm:$0xff]
        %v1163 = vld [vmem:[#allocation9 + $0x8] sm:$0xff]
        %v1164 = vld [vmem:[#allocation9 + $0x10] sm:$0xff]
        %v1165 = vld [vmem:[#allocation9 + $0x18] sm:$0xff]
        %v1166 = vld [vmem:[#allocation9 + $0x20] sm:$0xff]
        %v1167 = vld [vmem:[#allocation9 + $0x28] sm:$0xff]
        %v1168 = vld [vmem:[#allocation9 + $0x30] sm:$0xff]
        %v1169 = vld [vmem:[#allocation9 + $0x38] sm:$0xff]
        %v1170 = vld [vmem:[%s4] sm:$0x1]
        %v1172 = vlaneseq
        %v1173 = vshrl.u32 %v1172, 7
        %v1174 = vsub.s32 0, %v1173
        %v1175 = vrot.slane %v1170, %v1174
        %vm1177 = vcmask 523264
        %v1179 = vsel %vm1177, %v1160, 0
        %v1182 = vsel %vm1177, %v1161, 0
        %1184 = vmatprep.subr.mxu0 0.0
        %1185 = vmatpush1.msra.mxu0 0.0
        %1186 = vmatprep.subr.mxu0 0.0
        %1187 = vmatpush1.msra.mxu0 0.0
        %1188 = vmatprep.subr.mxu0 0.0
        %1189 = vmatpush1.msra.mxu0 0.0
        %1190 = vmatprep.subr.mxu0 0.0
        %1191 = vmatpush1.msra.mxu0 0.0
        %1192 = vmatprep.subr.mxu0 0.0
        %1193 = vmatpush1.msra.mxu0 0.0
        %1194 = vmatprep.subr.mxu0 0.0
        %1195 = vmatpush1.msra.mxu0 0.0
        %1196 = vmatprep.subr.mxu0 0.0
        %1197 = vmatpush1.msra.mxu0 0.0
        %1198 = vmatprep.subr.mxu0 0.0
        %1199 = vmatpush1.msra.mxu0 0.0
        %1200 = vmatprep.subr.mxu0 0.0
        %1201 = vmatpush1.msra.mxu0 %v1169
        %1202 = vmatprep.subr.mxu0 0.0
        %1203 = vmatpush1.msra.mxu0 %v1168
        %1204 = vmatprep.subr.mxu0 0.0
        %1205 = vmatpush1.msra.mxu0 %v1167
        %1206 = vmatprep.subr.mxu0 0.0
        %1207 = vmatpush1.msra.mxu0 %v1166
        %1208 = vmatprep.subr.mxu0 0.0
        %1209 = vmatpush1.msra.mxu0 %v1165
        %1210 = vmatprep.subr.mxu0 0.0
        %1211 = vmatpush1.msra.mxu0 %v1164
        %1212 = vmatprep.subr.mxu0 0.0
        %1213 = vmatpush1.msra.mxu0 %v1163
        %1214 = vmatprep.subr.mxu0 0.0
        %1215 = vmatpush1.msra.mxu0 %v1162
        %1216 = vmatprep.subr.mxu0 0.0
        %1217 = vmatpush2.msra.mxu0 0.0
        %1218 = vmatprep.subr.mxu0 0.0
        %1219 = vmatpush2.msra.mxu0 0.0
        %1220 = vmatprep.subr.mxu0 0.0
        %1221 = vmatpush2.msra.mxu0 0.0
        %1222 = vmatprep.subr.mxu0 0.0
        %1223 = vmatpush2.msra.mxu0 0.0
        %1224 = vmatprep.subr.mxu0 0.0
        %1225 = vmatpush2.msra.mxu0 0.0
        %1226 = vmatprep.subr.mxu0 0.0
        %1227 = vmatpush2.msra.mxu0 0.0
        %1228 = vmatprep.subr.mxu0 0.0
        %1229 = vmatpush2.msra.mxu0 0.0
        %1230 = vmatprep.subr.mxu0 0.0
        %1231 = vmatpush2.msra.mxu0 0.0
        %1232 = vmatprep.subr.mxu0 0.0
        %1233 = vmatpush2.msra.mxu0 0.0
        %1234 = vmatprep.subr.mxu0 0.0
        %1235 = vmatpush2.msra.mxu0 0.0
        %1236 = vmatprep.subr.mxu0 0.0
        %1237 = vmatpush2.msra.mxu0 0.0
        %1238 = vmatprep.subr.mxu0 0.0
        %1239 = vmatpush2.msra.mxu0 0.0
        %1240 = vmatprep.subr.mxu0 0.0
        %1241 = vmatpush2.msra.mxu0 0.0
        %1242 = vmatprep.subr.mxu0 0.0
        %1243 = vmatpush2.msra.mxu0 0.0
        %1244 = vmatprep.subr.mxu0 0.0
        %1245 = vmatpush2.msra.mxu0 0.0
        %1246 = vmatprep.subr.mxu0 0.0
        %1247 = vmatpush2.msra.mxu0 0.0
        %1248 = vmatprep.mubr.f32.mxu0 0.0
        %1249 = vmatmul.mubr.f32.gmra.mxu0 %v1179
        %v1250 = vpop.f32.mrf.mxu0
        %v1251 = vadd.f32 %v1175, %v1250
        %v1252 = vpop.f32.mrf.mxu0
        %1253 = vmatprep.mubr.f32.mxu0 0.0
        %1254 = vmatmul.mubr.f32.gmra.mxu0 %v1182
        %v1255 = vpop.f32.mrf.mxu0
        %v1256 = vadd.f32 %v1175, %v1255
        %v1257 = vpop.f32.mrf.mxu0
        %1258 = vdwg.mxu0
        %1259 = vst [vmem:[%s352] sm:$0xff] %v1251
        %1260 = vst [vmem:[%s352 + $0x8] sm:$0xff] %v1256
        %s1261 = sand.u32 %s170, 1
        %s1262 = scalar_lea.sflag [#allocation5], %s1261
        %s1263 = sand.u32 %s170, 1
        %s1264 = smul.addr %s1263, 16
        %s1265 = scalar_lea.vmem [#allocation11], %s1264
        // Predicated region
        $region57: #{tpu_custom_call.1} parent=39 // pred_check
          %p1266 = pneg %p180
        $region58: #{tpu_custom_call.1} parent=39 // pred_check_branch
          %1268 = sbr.rel (%p1266) target = $region60
        $region59: #{tpu_custom_call.1} parent=39 // pred_region
          %s1269 = smul.u32 2, %s31
          %s1271 = ssub.s32 256, 256
          %1272 = vsyncadd %s1262, %s1271
          %s1273 = smul.addr %s30, 2
          %s1274 = sadd.s32 %s1269, %s1273
          %s1275 = smul.addr %s1274, 128
          %s1276 = scalar_lea.hbm %s5, %s1275
          %s1277 = sshll.u32 %s1265, 4
          %s1278 = int_to_ptr.vmem [resolvable:$true] %s1277
          %1283 = dma.vmem_to_hbm [thread:$0]  %s1278, 256, %s1276, %s1262, 128, 128, 8
        $region60: #{tpu_custom_call.1} parent=39 // pred_fallthru
          _
      $region40: #{tpu_custom_call.1} parent=5 // pred_fallthru
        _
      %p1284 = scmp.le.s32.totalorder 2, %s21
      // Predicated region
      $region61: #{tpu_custom_call.1} parent=5 // pred_check
        %p1285 = pneg %p1284
      $region62: #{tpu_custom_call.1} parent=5 // pred_check_branch
        %1287 = sbr.rel (%p1285) target = $region64
      $region63: #{tpu_custom_call.1} parent=5 // pred_region
        %s1288 = ssub.s32 %s21, 2
        // Predicated region
        $region65: #{tpu_custom_call.1} parent=63 // pred_check
          %p1289 = pneg %p186
        $region66: #{tpu_custom_call.1} parent=63 // pred_check_branch
          %1291 = sbr.rel (%p1289) target = $region68
        $region67: #{tpu_custom_call.1} parent=63 // pred_region
          %s1292 = sand.u32 %s171, 1
          %s1293 = scalar_lea.sflag [#allocation5], %s1292
          %s1294 = sand.u32 %s171, 1
          %s1295 = smul.addr %s1294, 16
          %s1296 = scalar_lea.vmem [#allocation11], %s1295
          %1297 = dma.done %s1293, 256
        $region68: #{tpu_custom_call.1} parent=63 // pred_fallthru
          _
      $region64: #{tpu_custom_call.1} parent=5 // pred_fallthru
        _
    $region6: #{tpu_custom_call.1} parent=1 // loop_footer
      %s25 = sadd.s32 1, %s21
    $region7: #{tpu_custom_call.1} parent=1 // loop_footer_branch
      %20 = sbr.rel target = $region3
    $region8: #{tpu_custom_call.1} parent=1 // loop_exit
      _
    %1298 = vsyncpa [#allocation4], 1
    %s1299 = scalar_lea.sflag [#allocation4], 1
    %1300 = vsyncpa %s1299, 1
    %1301 = vsyncpa [#allocation7], 1
    %s1302 = scalar_lea.sflag [#allocation7], 1
    %1303 = vsyncpa %s1302, 1
    %1304 = vsyncpa [#allocation10], 1
    %1305 = vsyncpa [#allocation5], 1
    %s1306 = scalar_lea.sflag [#allocation5], 1
    %1307 = vsyncpa %s1306, 1

</llo_original>
